<compile_context>
chip_gen: v5e
topology: v5e:2x2
jax: 0.10.0
libtpu: 0.0.40
codegen_flags: <defaults>
</compile_context>

<pallas_src>
import functools

import jax
import jax.numpy as jnp
from jax.experimental import pallas as pl
from jax.experimental.pallas import tpu as pltpu

DOF = 7
POSE_DIM = 7
QP_DIM = DOF + POSE_DIM            # 14
HIDDEN = 512
TIME_EMBED = 64
IN_DIM = QP_DIM + TIME_EMBED       # 78
LN_EPS = 1e-5


def _round_up(x, m):
    return (x + m - 1) // m * m


def _default_bf16_silu():
    """bf16 EUP/VPU exists on v6e and newer; keep f32 SiLU on v5 and older."""
    try:
        kind = jax.devices()[0].device_kind.lower()
    except Exception:
        return False
    return not any(v in kind for v in ("v2", "v3", "v4", "v5"))


def _silu_to_bf16(x, *, bf16_eup):
    """SiLU whose result is bf16 (feeds the next MXU matmul directly).

    bf16_eup=True : logistic+mul computed in bf16 (v6e/v7x EUP, ~2x f32).
    bf16_eup=False: f32 logistic (v5e and older), cast to bf16 at the end.
    """
    if bf16_eup:
        xb = x.astype(jnp.bfloat16)
        return xb * jax.lax.logistic(xb)
    return (x * jax.lax.logistic(x)).astype(jnp.bfloat16)


def denoiser_kernel(qp_ref, t_ref,
                    te_w1_ref, te_b1_ref, te_w2_ref, te_b2_ref,
                    ln_g_qp_ref, ln_g_t_ref, ln_b_qp_ref, ln_b_t_ref,
                    w1_qp_ref, w1_t_ref, b1_ref,
                    w2_ref, b2_ref, w3_ref, b3_ref, w4_ref, b4_ref,
                    out_ref, *, bf16_eup):
    f32 = jnp.float32

    # ---- time embedding: Linear(1, 64) -> SiLU -> Linear(64, 64) ----
    t = t_ref[...]                                         # (Bt, 1) f32
    # Linear with in_features == 1: broadcast-mul instead of degenerate matmul.
    h = _silu_to_bf16(t * te_w1_ref[...] + te_b1_ref[...], bf16_eup=bf16_eup)
    t_embed = jnp.dot(h, te_w2_ref[...],
                      preferred_element_type=f32) + te_b2_ref[...]

    qp = qp_ref[...]                                       # (Bt, 14) f32

    # ---- LayerNorm over the virtual concat [q, pose, t_embed] (width 78) ----
    # Stats from the two pieces; the 78-lane concat is never materialized.
    total = (jnp.sum(qp, axis=-1, keepdims=True)
             + jnp.sum(t_embed, axis=-1, keepdims=True))
    mean = total * (1.0 / IN_DIM)
    qpc = qp - mean
    tc = t_embed - mean
    ssq = (jnp.sum(qpc * qpc, axis=-1, keepdims=True)
           + jnp.sum(tc * tc, axis=-1, keepdims=True))
    inv = jax.lax.rsqrt(ssq * (1.0 / IN_DIM) + LN_EPS)     # biased var (torch)
    qpn = qpc * inv * ln_g_qp_ref[...] + ln_b_qp_ref[...]
    tn = tc * inv * ln_g_t_ref[...] + ln_b_t_ref[...]

    # ---- Linear(78, 512) as two lane-dense matmuls (K=14 and K=64) ----
    h = (jnp.dot(qpn.astype(jnp.bfloat16), w1_qp_ref[...],
                 preferred_element_type=f32)
         + jnp.dot(tn.astype(jnp.bfloat16), w1_t_ref[...],
                   preferred_element_type=f32)
         + b1_ref[...])
    h = _silu_to_bf16(h, bf16_eup=bf16_eup)
    # Dropout(0.1) -> identity in eval mode.
    h = _silu_to_bf16(jnp.dot(h, w2_ref[...], preferred_element_type=f32)
                      + b2_ref[...], bf16_eup=bf16_eup)
    # Dropout(0.1) -> identity in eval mode.
    h = _silu_to_bf16(jnp.dot(h, w3_ref[...], preferred_element_type=f32)
                      + b3_ref[...], bf16_eup=bf16_eup)
    # Dropout(0.1) -> identity in eval mode.
    out_ref[...] = (jnp.dot(h, w4_ref[...], preferred_element_type=f32)
                    + b4_ref[...])
    # TODO(synk): training-mode dropout masks (pltpu.prng_* / stateful_bernoulli)
    # are not implemented; this kernel matches module.eval() semantics.


def make_params(key):
    ks = jax.random.split(key, 12)
    scale = 0.02

    def lin(k, fan_in, fan_out):
        kw, kb = jax.random.split(k)
        w = scale * jax.random.normal(kw, (fan_in, fan_out), jnp.float32)
        b = scale * jax.random.normal(kb, (1, fan_out), jnp.float32)
        return w, b

    te_w1, te_b1 = lin(ks[0], 1, TIME_EMBED)
    te_w2, te_b2 = lin(ks[1], TIME_EMBED, TIME_EMBED)
    ln_g = jnp.ones((1, IN_DIM), jnp.float32)
    ln_b = jnp.zeros((1, IN_DIM), jnp.float32)
    w1, b1 = lin(ks[2], IN_DIM, HIDDEN)
    w2, b2 = lin(ks[3], HIDDEN, HIDDEN)
    w3, b3 = lin(ks[4], HIDDEN, HIDDEN)
    w4, b4 = lin(ks[5], HIDDEN, DOF)
    return (te_w1, te_b1, te_w2, te_b2, ln_g, ln_b,
            w1, b1, w2, b2, w3, b3, w4, b4)


def prepare_params(params):
    """One-time weight preparation. Call ONCE outside the sampling loop so no
    bf16 casts / slicing happen per denoiser invocation."""
    (te_w1, te_b1, te_w2, te_b2, ln_g, ln_b,
     w1, b1, w2, b2, w3, b3, w4, b4) = params
    bf16 = jnp.bfloat16
    return (
        te_w1, te_b1, te_w2.astype(bf16), te_b2,
        ln_g[:, :QP_DIM], ln_g[:, QP_DIM:],
        ln_b[:, :QP_DIM], ln_b[:, QP_DIM:],
        w1[:QP_DIM].astype(bf16), w1[QP_DIM:].astype(bf16), b1,
        w2.astype(bf16), b2, w3.astype(bf16), b3, w4.astype(bf16), b4,
    )


def diffik_denoiser(q_t, pose, t, prepared, *, block_batch=512, bf16_silu=None):
    """q_t: (B, dof), pose: (B, pose_dim), t: (B,) -> (B, dof). Eval-mode fwd.

    `prepared` must come from prepare_params(); do that once, outside any
    per-step sampling loop.
    """
    if bf16_silu is None:
        bf16_silu = _default_bf16_silu()

    B = q_t.shape[0]
    qp = jnp.concatenate([q_t.astype(jnp.float32),
                          pose.astype(jnp.float32)], axis=-1)   # (B, 14)
    t2d = t.astype(jnp.float32).reshape(B, 1)                   # t.unsqueeze(-1)

    # Batch tiling: multiple of 8 sublanes. If everything fits in one tile,
    # still split into >=2 tiles so the "parallel" axis feeds both v7x TCs.
    block_batch = max(8, _round_up(int(block_batch), 8))
    bp8 = _round_up(B, 8)
    if bp8 <= block_batch:
        bt = _round_up(pl.cdiv(bp8, 2), 8)
    else:
        bt = block_batch
    bp = _round_up(B, bt)
    pad = bp - B
    if pad:
        qp = jnp.pad(qp, ((0, pad), (0, 0)))
        t2d = jnp.pad(t2d, ((0, pad), (0, 0)))

    grid = (bp // bt,)

    def tile_spec(feat):
        return pl.BlockSpec((bt, feat), lambda i: (i, 0))

    def const_spec(arr):
        # Constant block index -> weight DMA'd once, resident across tiles.
        return pl.BlockSpec(arr.shape, lambda i: (0, 0))

    in_specs = ([tile_spec(QP_DIM), tile_spec(1)]
                + [const_spec(w) for w in prepared])
    out_specs = tile_spec(DOF)

    flops_row = 2 * (TIME_EMBED * TIME_EMBED + IN_DIM * HIDDEN
                     + 2 * HIDDEN * HIDDEN + HIDDEN * DOF)
    weight_bytes = sum(int(w.size) * w.dtype.itemsize for w in prepared)
    io_bytes = bp * (QP_DIM + 1 + DOF) * 4          # inputs + output writeback
    cost = pl.CostEstimate(
        flops=int(bp * flops_row),
        transcendentals=int(bp * (TIME_EMBED + 3 * HIDDEN)),
        bytes_accessed=int(weight_bytes + io_bytes),
    )

    kernel = functools.partial(denoiser_kernel, bf16_eup=bool(bf16_silu))

    out = pl.pallas_call(
        kernel,
        out_shape=jax.ShapeDtypeStruct((bp, DOF), jnp.float32),
        grid=grid,
        in_specs=in_specs,
        out_specs=out_specs,
        compiler_params=pltpu.CompilerParams(
            dimension_semantics=("parallel",)),
        cost_estimate=cost,
    )(qp, t2d, *prepared)

    return out[:B] if pad else out


def reference(q_t, pose, t, params):
    """Pure-f32 JAX reference matching the PyTorch module in eval mode."""
    (te_w1, te_b1, te_w2, te_b2, ln_g, ln_b,
     w1, b1, w2, b2, w3, b3, w4, b4) = params
    t2d = t.astype(jnp.float32).reshape(-1, 1)
    h = jax.nn.silu(t2d @ te_w1 + te_b1)
    t_embed = h @ te_w2 + te_b2
    x = jnp.concatenate([q_t, pose, t_embed], axis=-1)
    mean = jnp.mean(x, axis=-1, keepdims=True)
    var = jnp.mean((x - mean) ** 2, axis=-1, keepdims=True)
    x = (x - mean) / jnp.sqrt(var + LN_EPS) * ln_g + ln_b
    h = jax.nn.silu(x @ w1 + b1)
    h = jax.nn.silu(h @ w2 + b2)
    h = jax.nn.silu(h @ w3 + b3)
    return h @ w4 + b4


if __name__ == "__main__":
    key = jax.random.PRNGKey(0)
    k_q, k_p, k_t, k_w = jax.random.split(key, 4)
    params = make_params(k_w)
    prepared = prepare_params(params)   # one-time prep (outside sampling loop)

    # Small case: single/double batch tile.
    B = 8
    q_t = jax.random.normal(k_q, (B, DOF), jnp.float32)
    pose = jax.random.normal(k_p, (B, POSE_DIM), jnp.float32)
    t = jax.random.uniform(k_t, (B,), jnp.float32, 0.0, 1.0)

    out = jax.block_until_ready(diffik_denoiser(q_t, pose, t, prepared))
    ref = reference(q_t, pose, t, params)
    assert out.shape == (B, DOF)
    assert jnp.allclose(out, ref, atol=1e-2, rtol=1e-2), (
        "mismatch vs JAX reference (small batch)")

    # Multi-tile case: exercises the batch grid + tail padding path.
    B2 = 200
    q2 = jax.random.normal(k_q, (B2, DOF), jnp.float32)
    p2 = jax.random.normal(k_p, (B2, POSE_DIM), jnp.float32)
    t2 = jax.random.uniform(k_t, (B2,), jnp.float32, 0.0, 1.0)

    out2 = jax.block_until_ready(
        diffik_denoiser(q2, p2, t2, prepared, block_batch=64))
    ref2 = reference(q2, p2, t2, params)
    assert out2.shape == (B2, DOF)
    assert jnp.allclose(out2, ref2, atol=1e-2, rtol=1e-2), (
        "mismatch vs JAX reference (gridded batch)")

    print("KERNEL_OK")
</pallas_src>

<mosaic_0001>
module attributes {stable_mosaic.version = 11 : i64} {
  func.func @denoiser_kernel(%arg0: i32, %arg1: memref<8x14xf32, #tpu.memory_space<vmem>>, %arg2: memref<8x1xf32, #tpu.memory_space<vmem>>, %arg3: memref<1x64xf32, #tpu.memory_space<vmem>>, %arg4: memref<1x64xf32, #tpu.memory_space<vmem>>, %arg5: memref<64x64xbf16, #tpu.memory_space<vmem>>, %arg6: memref<1x64xf32, #tpu.memory_space<vmem>>, %arg7: memref<1x14xf32, #tpu.memory_space<vmem>>, %arg8: memref<1x64xf32, #tpu.memory_space<vmem>>, %arg9: memref<1x14xf32, #tpu.memory_space<vmem>>, %arg10: memref<1x64xf32, #tpu.memory_space<vmem>>, %arg11: memref<14x512xbf16, #tpu.memory_space<vmem>>, %arg12: memref<64x512xbf16, #tpu.memory_space<vmem>>, %arg13: memref<1x512xf32, #tpu.memory_space<vmem>>, %arg14: memref<512x512xbf16, #tpu.memory_space<vmem>>, %arg15: memref<1x512xf32, #tpu.memory_space<vmem>>, %arg16: memref<512x512xbf16, #tpu.memory_space<vmem>>, %arg17: memref<1x512xf32, #tpu.memory_space<vmem>>, %arg18: memref<512x7xbf16, #tpu.memory_space<vmem>>, %arg19: memref<1x7xf32, #tpu.memory_space<vmem>>, %arg20: memref<8x7xf32, #tpu.memory_space<vmem>>) attributes {dimension_semantics = [#tpu.dimension_semantics<parallel>], iteration_bounds = array<i64: 1>, scalar_prefetch = 0 : i64, scratch_operands = 0 : i64, tpu.core_type = #tpu.core_type<tc>, window_params = [{transform_indices = @transform_0, window_bounds = array<i64: 8, 14>}, {transform_indices = @transform_1, window_bounds = array<i64: 8, 1>}, {pipeline_mode = #tpu.pipeline_mode<synchronous>, transform_indices = @transform_2, window_bounds = array<i64: 1, 64>}, {pipeline_mode = #tpu.pipeline_mode<synchronous>, transform_indices = @transform_3, window_bounds = array<i64: 1, 64>}, {pipeline_mode = #tpu.pipeline_mode<synchronous>, transform_indices = @transform_4, window_bounds = array<i64: 64, 64>}, {pipeline_mode = #tpu.pipeline_mode<synchronous>, transform_indices = @transform_5, window_bounds = array<i64: 1, 64>}, {pipeline_mode = #tpu.pipeline_mode<synchronous>, transform_indices = @transform_6, window_bounds = array<i64: 1, 14>}, {pipeline_mode = #tpu.pipeline_mode<synchronous>, transform_indices = @transform_7, window_bounds = array<i64: 1, 64>}, {pipeline_mode = #tpu.pipeline_mode<synchronous>, transform_indices = @transform_8, window_bounds = array<i64: 1, 14>}, {pipeline_mode = #tpu.pipeline_mode<synchronous>, transform_indices = @transform_9, window_bounds = array<i64: 1, 64>}, {pipeline_mode = #tpu.pipeline_mode<synchronous>, transform_indices = @transform_10, window_bounds = array<i64: 14, 512>}, {pipeline_mode = #tpu.pipeline_mode<synchronous>, transform_indices = @transform_11, window_bounds = array<i64: 64, 512>}, {pipeline_mode = #tpu.pipeline_mode<synchronous>, transform_indices = @transform_12, window_bounds = array<i64: 1, 512>}, {pipeline_mode = #tpu.pipeline_mode<synchronous>, transform_indices = @transform_13, window_bounds = array<i64: 512, 512>}, {pipeline_mode = #tpu.pipeline_mode<synchronous>, transform_indices = @transform_14, window_bounds = array<i64: 1, 512>}, {pipeline_mode = #tpu.pipeline_mode<synchronous>, transform_indices = @transform_15, window_bounds = array<i64: 512, 512>}, {pipeline_mode = #tpu.pipeline_mode<synchronous>, transform_indices = @transform_16, window_bounds = array<i64: 1, 512>}, {pipeline_mode = #tpu.pipeline_mode<synchronous>, transform_indices = @transform_17, window_bounds = array<i64: 512, 7>}, {pipeline_mode = #tpu.pipeline_mode<synchronous>, transform_indices = @transform_18, window_bounds = array<i64: 1, 7>}, {transform_indices = @transform_19, window_bounds = array<i64: 8, 7>}]} {
    %c0 = arith.constant 0 : index
    %c0_0 = arith.constant 0 : index
    %0 = vector.load %arg2[%c0, %c0_0] : memref<8x1xf32, #tpu.memory_space<vmem>>, vector<8x1xf32>
    %c0_1 = arith.constant 0 : index
    %c0_2 = arith.constant 0 : index
    %1 = vector.load %arg3[%c0_1, %c0_2] : memref<1x64xf32, #tpu.memory_space<vmem>>, vector<1x64xf32>
    %2 = vector.broadcast %0 : vector<8x1xf32> to vector<8x64xf32>
    %3 = vector.broadcast %1 : vector<1x64xf32> to vector<8x64xf32>
    %4 = arith.mulf %2, %3 : vector<8x64xf32>
    %c0_3 = arith.constant 0 : index
    %c0_4 = arith.constant 0 : index
    %5 = vector.load %arg4[%c0_3, %c0_4] : memref<1x64xf32, #tpu.memory_space<vmem>>, vector<1x64xf32>
    %6 = vector.broadcast %5 : vector<1x64xf32> to vector<8x64xf32>
    %7 = arith.addf %4, %6 : vector<8x64xf32>
    %8 = arith.truncf %7 : vector<8x64xf32> to vector<8x64xbf16>
    %9 = arith.negf %8 : vector<8x64xbf16>
    %10 = math.exp %9 : vector<8x64xbf16>
    %cst = arith.constant 1.000000e+00 : bf16
    %11 = vector.broadcast %cst : bf16 to vector<8x64xbf16>
    %12 = arith.addf %11, %10 : vector<8x64xbf16>
    %13 = arith.divf %11, %12 : vector<8x64xbf16>
    %14 = arith.mulf %8, %13 : vector<8x64xbf16>
    %c0_5 = arith.constant 0 : index
    %c0_6 = arith.constant 0 : index
    %15 = vector.load %arg5[%c0_5, %c0_6] : memref<64x64xbf16, #tpu.memory_space<vmem>>, vector<64x64xbf16>
    %cst_7 = arith.constant dense<0.000000e+00> : vector<8x64xf32>
    %16 = tpu.matmul %14, %15, %cst_7 {dimension_numbers = #tpu.dot_dimension_numbers<[1], [0], [0], [1], [0, 0, 1, 1], [], []>} : vector<8x64xbf16>, vector<64x64xbf16>, vector<8x64xf32> -> vector<8x64xf32>
    %c0_8 = arith.constant 0 : index
    %c0_9 = arith.constant 0 : index
    %17 = vector.load %arg6[%c0_8, %c0_9] : memref<1x64xf32, #tpu.memory_space<vmem>>, vector<1x64xf32>
    %18 = vector.broadcast %17 : vector<1x64xf32> to vector<8x64xf32>
    %19 = arith.addf %16, %18 : vector<8x64xf32>
    %c0_10 = arith.constant 0 : index
    %c0_11 = arith.constant 0 : index
    %20 = vector.load %arg1[%c0_10, %c0_11] : memref<8x14xf32, #tpu.memory_space<vmem>>, vector<8x14xf32>
    %cst_12 = arith.constant dense<0.000000e+00> : vector<8xf32>
    %21 = vector.multi_reduction <add>, %20, %cst_12 [1] : vector<8x14xf32> to vector<8xf32>
    %22 = vector.shape_cast %21 : vector<8xf32> to vector<8x1xf32>
    %cst_13 = arith.constant dense<0.000000e+00> : vector<8xf32>
    %23 = vector.multi_reduction <add>, %19, %cst_13 [1] : vector<8x64xf32> to vector<8xf32>
    %24 = vector.shape_cast %23 : vector<8xf32> to vector<8x1xf32>
    %25 = arith.addf %22, %24 : vector<8x1xf32>
    %cst_14 = arith.constant 0.012820513 : f32
    %26 = vector.broadcast %cst_14 : f32 to vector<8x1xf32>
    %27 = arith.mulf %25, %26 : vector<8x1xf32>
    %28 = vector.broadcast %27 : vector<8x1xf32> to vector<8x14xf32>
    %29 = arith.subf %20, %28 : vector<8x14xf32>
    %30 = vector.broadcast %27 : vector<8x1xf32> to vector<8x64xf32>
    %31 = arith.subf %19, %30 : vector<8x64xf32>
    %32 = arith.mulf %29, %29 : vector<8x14xf32>
    %cst_15 = arith.constant dense<0.000000e+00> : vector<8xf32>
    %33 = vector.multi_reduction <add>, %32, %cst_15 [1] : vector<8x14xf32> to vector<8xf32>
    %34 = vector.shape_cast %33 : vector<8xf32> to vector<8x1xf32>
    %35 = arith.mulf %31, %31 : vector<8x64xf32>
    %cst_16 = arith.constant dense<0.000000e+00> : vector<8xf32>
    %36 = vector.multi_reduction <add>, %35, %cst_16 [1] : vector<8x64xf32> to vector<8xf32>
    %37 = vector.shape_cast %36 : vector<8xf32> to vector<8x1xf32>
    %38 = arith.addf %34, %37 : vector<8x1xf32>
    %cst_17 = arith.constant 0.012820513 : f32
    %39 = vector.broadcast %cst_17 : f32 to vector<8x1xf32>
    %40 = arith.mulf %38, %39 : vector<8x1xf32>
    %cst_18 = arith.constant 9.99999974E-6 : f32
    %41 = vector.broadcast %cst_18 : f32 to vector<8x1xf32>
    %42 = arith.addf %40, %41 : vector<8x1xf32>
    %43 = math.rsqrt %42 : vector<8x1xf32>
    %44 = vector.broadcast %43 : vector<8x1xf32> to vector<8x14xf32>
    %45 = arith.mulf %29, %44 : vector<8x14xf32>
    %c0_19 = arith.constant 0 : index
    %c0_20 = arith.constant 0 : index
    %46 = vector.load %arg7[%c0_19, %c0_20] : memref<1x14xf32, #tpu.memory_space<vmem>>, vector<1x14xf32>
    %47 = vector.broadcast %46 : vector<1x14xf32> to vector<8x14xf32>
    %48 = arith.mulf %45, %47 : vector<8x14xf32>
    %c0_21 = arith.constant 0 : index
    %c0_22 = arith.constant 0 : index
    %49 = vector.load %arg9[%c0_21, %c0_22] : memref<1x14xf32, #tpu.memory_space<vmem>>, vector<1x14xf32>
    %50 = vector.broadcast %49 : vector<1x14xf32> to vector<8x14xf32>
    %51 = arith.addf %48, %50 : vector<8x14xf32>
    %52 = vector.broadcast %43 : vector<8x1xf32> to vector<8x64xf32>
    %53 = arith.mulf %31, %52 : vector<8x64xf32>
    %c0_23 = arith.constant 0 : index
    %c0_24 = arith.constant 0 : index
    %54 = vector.load %arg8[%c0_23, %c0_24] : memref<1x64xf32, #tpu.memory_space<vmem>>, vector<1x64xf32>
    %55 = vector.broadcast %54 : vector<1x64xf32> to vector<8x64xf32>
    %56 = arith.mulf %53, %55 : vector<8x64xf32>
    %c0_25 = arith.constant 0 : index
    %c0_26 = arith.constant 0 : index
    %57 = vector.load %arg10[%c0_25, %c0_26] : memref<1x64xf32, #tpu.memory_space<vmem>>, vector<1x64xf32>
    %58 = vector.broadcast %57 : vector<1x64xf32> to vector<8x64xf32>
    %59 = arith.addf %56, %58 : vector<8x64xf32>
    %60 = arith.truncf %51 : vector<8x14xf32> to vector<8x14xbf16>
    %c0_27 = arith.constant 0 : index
    %c0_28 = arith.constant 0 : index
    %61 = vector.load %arg11[%c0_27, %c0_28] : memref<14x512xbf16, #tpu.memory_space<vmem>>, vector<14x512xbf16>
    %cst_29 = arith.constant dense<0.000000e+00> : vector<8x512xf32>
    %62 = tpu.matmul %60, %61, %cst_29 {dimension_numbers = #tpu.dot_dimension_numbers<[1], [0], [0], [1], [0, 0, 1, 1], [], []>} : vector<8x14xbf16>, vector<14x512xbf16>, vector<8x512xf32> -> vector<8x512xf32>
    %63 = arith.truncf %59 : vector<8x64xf32> to vector<8x64xbf16>
    %c0_30 = arith.constant 0 : index
    %c0_31 = arith.constant 0 : index
    %64 = vector.load %arg12[%c0_30, %c0_31] : memref<64x512xbf16, #tpu.memory_space<vmem>>, vector<64x512xbf16>
    %cst_32 = arith.constant dense<0.000000e+00> : vector<8x512xf32>
    %65 = tpu.matmul %63, %64, %cst_32 {dimension_numbers = #tpu.dot_dimension_numbers<[1], [0], [0], [1], [0, 0, 1, 1], [], []>} : vector<8x64xbf16>, vector<64x512xbf16>, vector<8x512xf32> -> vector<8x512xf32>
    %66 = arith.addf %62, %65 : vector<8x512xf32>
    %c0_33 = arith.constant 0 : index
    %c0_34 = arith.constant 0 : index
    %67 = vector.load %arg13[%c0_33, %c0_34] : memref<1x512xf32, #tpu.memory_space<vmem>>, vector<1x512xf32>
    %68 = vector.broadcast %67 : vector<1x512xf32> to vector<8x512xf32>
    %69 = arith.addf %66, %68 : vector<8x512xf32>
    %70 = arith.truncf %69 : vector<8x512xf32> to vector<8x512xbf16>
    %71 = arith.negf %70 : vector<8x512xbf16>
    %72 = math.exp %71 : vector<8x512xbf16>
    %cst_35 = arith.constant 1.000000e+00 : bf16
    %73 = vector.broadcast %cst_35 : bf16 to vector<8x512xbf16>
    %74 = arith.addf %73, %72 : vector<8x512xbf16>
    %75 = arith.divf %73, %74 : vector<8x512xbf16>
    %76 = arith.mulf %70, %75 : vector<8x512xbf16>
    %c0_36 = arith.constant 0 : index
    %c0_37 = arith.constant 0 : index
    %77 = vector.load %arg14[%c0_36, %c0_37] : memref<512x512xbf16, #tpu.memory_space<vmem>>, vector<512x512xbf16>
    %cst_38 = arith.constant dense<0.000000e+00> : vector<8x512xf32>
    %78 = tpu.matmul %76, %77, %cst_38 {dimension_numbers = #tpu.dot_dimension_numbers<[1], [0], [0], [1], [0, 0, 1, 1], [], []>} : vector<8x512xbf16>, vector<512x512xbf16>, vector<8x512xf32> -> vector<8x512xf32>
    %c0_39 = arith.constant 0 : index
    %c0_40 = arith.constant 0 : index
    %79 = vector.load %arg15[%c0_39, %c0_40] : memref<1x512xf32, #tpu.memory_space<vmem>>, vector<1x512xf32>
    %80 = vector.broadcast %79 : vector<1x512xf32> to vector<8x512xf32>
    %81 = arith.addf %78, %80 : vector<8x512xf32>
    %82 = arith.truncf %81 : vector<8x512xf32> to vector<8x512xbf16>
    %83 = arith.negf %82 : vector<8x512xbf16>
    %84 = math.exp %83 : vector<8x512xbf16>
    %cst_41 = arith.constant 1.000000e+00 : bf16
    %85 = vector.broadcast %cst_41 : bf16 to vector<8x512xbf16>
    %86 = arith.addf %85, %84 : vector<8x512xbf16>
    %87 = arith.divf %85, %86 : vector<8x512xbf16>
    %88 = arith.mulf %82, %87 : vector<8x512xbf16>
    %c0_42 = arith.constant 0 : index
    %c0_43 = arith.constant 0 : index
    %89 = vector.load %arg16[%c0_42, %c0_43] : memref<512x512xbf16, #tpu.memory_space<vmem>>, vector<512x512xbf16>
    %cst_44 = arith.constant dense<0.000000e+00> : vector<8x512xf32>
    %90 = tpu.matmul %88, %89, %cst_44 {dimension_numbers = #tpu.dot_dimension_numbers<[1], [0], [0], [1], [0, 0, 1, 1], [], []>} : vector<8x512xbf16>, vector<512x512xbf16>, vector<8x512xf32> -> vector<8x512xf32>
    %c0_45 = arith.constant 0 : index
    %c0_46 = arith.constant 0 : index
    %91 = vector.load %arg17[%c0_45, %c0_46] : memref<1x512xf32, #tpu.memory_space<vmem>>, vector<1x512xf32>
    %92 = vector.broadcast %91 : vector<1x512xf32> to vector<8x512xf32>
    %93 = arith.addf %90, %92 : vector<8x512xf32>
    %94 = arith.truncf %93 : vector<8x512xf32> to vector<8x512xbf16>
    %95 = arith.negf %94 : vector<8x512xbf16>
    %96 = math.exp %95 : vector<8x512xbf16>
    %cst_47 = arith.constant 1.000000e+00 : bf16
    %97 = vector.broadcast %cst_47 : bf16 to vector<8x512xbf16>
    %98 = arith.addf %97, %96 : vector<8x512xbf16>
    %99 = arith.divf %97, %98 : vector<8x512xbf16>
    %100 = arith.mulf %94, %99 : vector<8x512xbf16>
    %c0_48 = arith.constant 0 : index
    %c0_49 = arith.constant 0 : index
    %101 = vector.load %arg18[%c0_48, %c0_49] : memref<512x7xbf16, #tpu.memory_space<vmem>>, vector<512x7xbf16>
    %cst_50 = arith.constant dense<0.000000e+00> : vector<8x7xf32>
    %102 = tpu.matmul %100, %101, %cst_50 {dimension_numbers = #tpu.dot_dimension_numbers<[1], [0], [0], [1], [0, 0, 1, 1], [], []>} : vector<8x512xbf16>, vector<512x7xbf16>, vector<8x7xf32> -> vector<8x7xf32>
    %c0_51 = arith.constant 0 : index
    %c0_52 = arith.constant 0 : index
    %103 = vector.load %arg19[%c0_51, %c0_52] : memref<1x7xf32, #tpu.memory_space<vmem>>, vector<1x7xf32>
    %104 = vector.broadcast %103 : vector<1x7xf32> to vector<8x7xf32>
    %105 = arith.addf %102, %104 : vector<8x7xf32>
    %c0_53 = arith.constant 0 : index
    %c0_54 = arith.constant 0 : index
    %106 = vector.load %arg20[%c0_53, %c0_54] : memref<8x7xf32, #tpu.memory_space<vmem>>, vector<8x7xf32>
    tpu.vector_store %arg20[%c0_53, %c0_54], %105 {strides = array<i32>} : memref<8x7xf32, #tpu.memory_space<vmem>>, vector<8x7xf32>,
    return
  }
  func.func @transform_0(%arg0: i32) -> (i32, i32) {
    %c0_i32 = arith.constant 0 : i32
    %c0_i32_0 = arith.constant 0 : i32
    return %arg0, %c0_i32 : i32, i32
  }
  func.func @transform_1(%arg0: i32) -> (i32, i32) {
    %c0_i32 = arith.constant 0 : i32
    %c0_i32_0 = arith.constant 0 : i32
    return %arg0, %c0_i32 : i32, i32
  }
  func.func @transform_2(%arg0: i32) -> (i32, i32) {
    %c0_i32 = arith.constant 0 : i32
    %c0_i32_0 = arith.constant 0 : i32
    %c0_i32_1 = arith.constant 0 : i32
    return %c0_i32, %c0_i32_0 : i32, i32
  }
  func.func @transform_3(%arg0: i32) -> (i32, i32) {
    %c0_i32 = arith.constant 0 : i32
    %c0_i32_0 = arith.constant 0 : i32
    %c0_i32_1 = arith.constant 0 : i32
    return %c0_i32, %c0_i32_0 : i32, i32
  }
  func.func @transform_4(%arg0: i32) -> (i32, i32) {
    %c0_i32 = arith.constant 0 : i32
    %c0_i32_0 = arith.constant 0 : i32
    %c0_i32_1 = arith.constant 0 : i32
    return %c0_i32, %c0_i32_0 : i32, i32
  }
  func.func @transform_5(%arg0: i32) -> (i32, i32) {
    %c0_i32 = arith.constant 0 : i32
    %c0_i32_0 = arith.constant 0 : i32
    %c0_i32_1 = arith.constant 0 : i32
    return %c0_i32, %c0_i32_0 : i32, i32
  }
  func.func @transform_6(%arg0: i32) -> (i32, i32) {
    %c0_i32 = arith.constant 0 : i32
    %c0_i32_0 = arith.constant 0 : i32
    %c0_i32_1 = arith.constant 0 : i32
    return %c0_i32, %c0_i32_0 : i32, i32
  }
  func.func @transform_7(%arg0: i32) -> (i32, i32) {
    %c0_i32 = arith.constant 0 : i32
    %c0_i32_0 = arith.constant 0 : i32
    %c0_i32_1 = arith.constant 0 : i32
    return %c0_i32, %c0_i32_0 : i32, i32
  }
  func.func @transform_8(%arg0: i32) -> (i32, i32) {
    %c0_i32 = arith.constant 0 : i32
    %c0_i32_0 = arith.constant 0 : i32
    %c0_i32_1 = arith.constant 0 : i32
    return %c0_i32, %c0_i32_0 : i32, i32
  }
  func.func @transform_9(%arg0: i32) -> (i32, i32) {
    %c0_i32 = arith.constant 0 : i32
    %c0_i32_0 = arith.constant 0 : i32
    %c0_i32_1 = arith.constant 0 : i32
    return %c0_i32, %c0_i32_0 : i32, i32
  }
  func.func @transform_10(%arg0: i32) -> (i32, i32) {
    %c0_i32 = arith.constant 0 : i32
    %c0_i32_0 = arith.constant 0 : i32
    %c0_i32_1 = arith.constant 0 : i32
    return %c0_i32, %c0_i32_0 : i32, i32
  }
  func.func @transform_11(%arg0: i32) -> (i32, i32) {
    %c0_i32 = arith.constant 0 : i32
    %c0_i32_0 = arith.constant 0 : i32
    %c0_i32_1 = arith.constant 0 : i32
    return %c0_i32, %c0_i32_0 : i32, i32
  }
  func.func @transform_12(%arg0: i32) -> (i32, i32) {
    %c0_i32 = arith.constant 0 : i32
    %c0_i32_0 = arith.constant 0 : i32
    %c0_i32_1 = arith.constant 0 : i32
    return %c0_i32, %c0_i32_0 : i32, i32
  }
  func.func @transform_13(%arg0: i32) -> (i32, i32) {
    %c0_i32 = arith.constant 0 : i32
    %c0_i32_0 = arith.constant 0 : i32
    %c0_i32_1 = arith.constant 0 : i32
    return %c0_i32, %c0_i32_0 : i32, i32
  }
  func.func @transform_14(%arg0: i32) -> (i32, i32) {
    %c0_i32 = arith.constant 0 : i32
    %c0_i32_0 = arith.constant 0 : i32
    %c0_i32_1 = arith.constant 0 : i32
    return %c0_i32, %c0_i32_0 : i32, i32
  }
  func.func @transform_15(%arg0: i32) -> (i32, i32) {
    %c0_i32 = arith.constant 0 : i32
    %c0_i32_0 = arith.constant 0 : i32
    %c0_i32_1 = arith.constant 0 : i32
    return %c0_i32, %c0_i32_0 : i32, i32
  }
  func.func @transform_16(%arg0: i32) -> (i32, i32) {
    %c0_i32 = arith.constant 0 : i32
    %c0_i32_0 = arith.constant 0 : i32
    %c0_i32_1 = arith.constant 0 : i32
    return %c0_i32, %c0_i32_0 : i32, i32
  }
  func.func @transform_17(%arg0: i32) -> (i32, i32) {
    %c0_i32 = arith.constant 0 : i32
    %c0_i32_0 = arith.constant 0 : i32
    %c0_i32_1 = arith.constant 0 : i32
    return %c0_i32, %c0_i32_0 : i32, i32
  }
  func.func @transform_18(%arg0: i32) -> (i32, i32) {
    %c0_i32 = arith.constant 0 : i32
    %c0_i32_0 = arith.constant 0 : i32
    %c0_i32_1 = arith.constant 0 : i32
    return %c0_i32, %c0_i32_0 : i32, i32
  }
  func.func @transform_19(%arg0: i32) -> (i32, i32) {
    %c0_i32 = arith.constant 0 : i32
    %c0_i32_0 = arith.constant 0 : i32
    return %arg0, %c0_i32 : i32, i32
  }
}

</mosaic_0001>

<llo_original>
// kernel: tpu_custom_call.1
$region0: #{tpu_custom_call.1}
  #allocation0 [shape = 'u32[]', space=smem, size = 0x4, offset = 0x4, fixed_abs, tag = 'smem constant byte address 0x4 - core index']
  #allocation1 [shape = 'u32[72,128]{1,0:T(1,128)}', space=vmem, size = 0x9000, scoped, tag = 'internal scratch']
  %s0 = inlined_call_operand.vmem [shape: f32[8,14], index: 0, kind: input, shape index: {}]
  %s1 = inlined_call_operand.vmem [shape: f32[8,1], index: 1, kind: input, shape index: {}]
  %s2 = inlined_call_operand.vmem [shape: f32[1,64], index: 2, kind: input, shape index: {}]
  %s3 = inlined_call_operand.vmem [shape: f32[1,64], index: 3, kind: input, shape index: {}]
  %s4 = inlined_call_operand.vmem [shape: bf16[64,64], index: 4, kind: input, shape index: {}]
  %s5 = inlined_call_operand.vmem [shape: f32[1,64], index: 5, kind: input, shape index: {}]
  %s6 = inlined_call_operand.vmem [shape: f32[1,14], index: 6, kind: input, shape index: {}]
  %s7 = inlined_call_operand.vmem [shape: f32[1,64], index: 7, kind: input, shape index: {}]
  %s8 = inlined_call_operand.vmem [shape: f32[1,14], index: 8, kind: input, shape index: {}]
  %s9 = inlined_call_operand.vmem [shape: f32[1,64], index: 9, kind: input, shape index: {}]
  %s10 = inlined_call_operand.vmem [shape: bf16[14,512], index: 10, kind: input, shape index: {}]
  %s11 = inlined_call_operand.vmem [shape: bf16[64,512], index: 11, kind: input, shape index: {}]
  %s12 = inlined_call_operand.vmem [shape: f32[1,512], index: 12, kind: input, shape index: {}]
  %s13 = inlined_call_operand.hbm [shape: bf16[512,512], index: 13, kind: input, shape index: {}]
  %s14 = inlined_call_operand.vmem [shape: f32[1,512], index: 14, kind: input, shape index: {}]
  %s15 = inlined_call_operand.hbm [shape: bf16[512,512], index: 15, kind: input, shape index: {}]
  %s16 = inlined_call_operand.vmem [shape: f32[1,512], index: 16, kind: input, shape index: {}]
  %s17 = inlined_call_operand.vmem [shape: bf16[512,7], index: 17, kind: input, shape index: {}]
  %s18 = inlined_call_operand.vmem [shape: f32[1,7], index: 18, kind: input, shape index: {}]
  %s19 = inlined_call_operand.hbm [shape: f32[8,7], index: 19, kind: output, shape index: {}]
  %s20 = sld [smem:[#allocation0]]
  $region94: #{tpu_custom_call.1} parent=0
    _
  %s22 = ssub.s32 1, %s20
  %s23 = scalar_select 0, %s22, %s20
  $region1: #{tpu_custom_call.1} parent=0
    #allocation2 [shape = 'u8[524288]{0}', space=vmem, size = 0x80000, scoped, tag = 'input window, operand 13, single buffered']
    #allocation3 [shape = 's32[1]{0}', space=sflag, size = 0x4, scoped, tag = 'scoped memory for tpu_custom_call.1']
    #allocation4 [shape = 's32[1]{0}', space=sflag, size = 0x4, scoped, tag = 'scoped memory for tpu_custom_call.1']
    #allocation5 [shape = 'u8[524288]{0}', space=vmem, size = 0x80000, scoped, tag = 'input window, operand 15, single buffered']
    #allocation6 [shape = 's32[1]{0}', space=sflag, size = 0x4, scoped, tag = 'scoped memory for tpu_custom_call.1']
    #allocation7 [shape = 'u8[4096]{0}', space=vmem, size = 0x1000, scoped, tag = 'output window, operand 0, single buffered']
    %24 = vsyncpa [#allocation3], 0
    %25 = vsyncpa [#allocation6], 0
    %26 = vsyncpa [#allocation4], 0
    // Predicated region
    $region2: #{tpu_custom_call.1} parent=1 // pred_check
      _
    $region3: #{tpu_custom_call.1} parent=1 // pred_check_branch
      %28 = sbr.rel (0) target = $region5
    $region4: #{tpu_custom_call.1} parent=1 // pred_region
      _
    $region5: #{tpu_custom_call.1} parent=1 // pred_fallthru
      _
    // Predicated region
    $region6: #{tpu_custom_call.1} parent=1 // pred_check
      _
    $region7: #{tpu_custom_call.1} parent=1 // pred_check_branch
      %30 = sbr.rel (0) target = $region9
    $region8: #{tpu_custom_call.1} parent=1 // pred_region
      _
    $region9: #{tpu_custom_call.1} parent=1 // pred_fallthru
      _
    // Predicated region
    $region10: #{tpu_custom_call.1} parent=1 // pred_check
      _
    $region11: #{tpu_custom_call.1} parent=1 // pred_check_branch
      %32 = sbr.rel (0) target = $region13
    $region12: #{tpu_custom_call.1} parent=1 // pred_region
      _
    $region13: #{tpu_custom_call.1} parent=1 // pred_fallthru
      _
    // Predicated region
    $region14: #{tpu_custom_call.1} parent=1 // pred_check
      _
    $region15: #{tpu_custom_call.1} parent=1 // pred_check_branch
      %34 = sbr.rel (0) target = $region17
    $region16: #{tpu_custom_call.1} parent=1 // pred_region
      _
    $region17: #{tpu_custom_call.1} parent=1 // pred_fallthru
      _
    // Predicated region
    $region18: #{tpu_custom_call.1} parent=1 // pred_check
      _
    $region19: #{tpu_custom_call.1} parent=1 // pred_check_branch
      %36 = sbr.rel (0) target = $region21
    $region20: #{tpu_custom_call.1} parent=1 // pred_region
      _
    $region21: #{tpu_custom_call.1} parent=1 // pred_fallthru
      _
    // Predicated region
    $region22: #{tpu_custom_call.1} parent=1 // pred_check
      _
    $region23: #{tpu_custom_call.1} parent=1 // pred_check_branch
      %38 = sbr.rel (0) target = $region25
    $region24: #{tpu_custom_call.1} parent=1 // pred_region
      _
    $region25: #{tpu_custom_call.1} parent=1 // pred_fallthru
      _
    // Predicated region
    $region26: #{tpu_custom_call.1} parent=1 // pred_check
      _
    $region27: #{tpu_custom_call.1} parent=1 // pred_check_branch
      %40 = sbr.rel (0) target = $region29
    $region28: #{tpu_custom_call.1} parent=1 // pred_region
      _
    $region29: #{tpu_custom_call.1} parent=1 // pred_fallthru
      _
    // Predicated region
    $region30: #{tpu_custom_call.1} parent=1 // pred_check
      _
    $region31: #{tpu_custom_call.1} parent=1 // pred_check_branch
      %42 = sbr.rel (0) target = $region33
    $region32: #{tpu_custom_call.1} parent=1 // pred_region
      _
    $region33: #{tpu_custom_call.1} parent=1 // pred_fallthru
      _
    // Predicated region
    $region34: #{tpu_custom_call.1} parent=1 // pred_check
      _
    $region35: #{tpu_custom_call.1} parent=1 // pred_check_branch
      %44 = sbr.rel (0) target = $region37
    $region36: #{tpu_custom_call.1} parent=1 // pred_region
      _
    $region37: #{tpu_custom_call.1} parent=1 // pred_fallthru
      _
    // Predicated region
    $region38: #{tpu_custom_call.1} parent=1 // pred_check
      _
    $region39: #{tpu_custom_call.1} parent=1 // pred_check_branch
      %46 = sbr.rel (0) target = $region41
    $region40: #{tpu_custom_call.1} parent=1 // pred_region
      _
    $region41: #{tpu_custom_call.1} parent=1 // pred_fallthru
      _
    // Predicated region
    $region42: #{tpu_custom_call.1} parent=1 // pred_check
      _
    $region43: #{tpu_custom_call.1} parent=1 // pred_check_branch
      %48 = sbr.rel (0) target = $region45
    $region44: #{tpu_custom_call.1} parent=1 // pred_region
      _
    $region45: #{tpu_custom_call.1} parent=1 // pred_fallthru
      _
    // Predicated region
    $region46: #{tpu_custom_call.1} parent=1 // pred_check
      _
    $region47: #{tpu_custom_call.1} parent=1 // pred_check_branch
      %50 = sbr.rel (0) target = $region49
    $region48: #{tpu_custom_call.1} parent=1 // pred_region
      _
    $region49: #{tpu_custom_call.1} parent=1 // pred_fallthru
      _
    // Predicated region
    $region50: #{tpu_custom_call.1} parent=1 // pred_check
      _
    $region51: #{tpu_custom_call.1} parent=1 // pred_check_branch
      %52 = sbr.rel (0) target = $region53
    $region52: #{tpu_custom_call.1} parent=1 // pred_region
      _
    $region53: #{tpu_custom_call.1} parent=1 // pred_fallthru
      _
    // Predicated region
    $region54: #{tpu_custom_call.1} parent=1 // pred_check
      _
    $region55: #{tpu_custom_call.1} parent=1 // pred_check_branch
      %54 = sbr.rel (0) target = $region57
    $region56: #{tpu_custom_call.1} parent=1 // pred_region
      %56 = vsyncadd [#allocation3], 0
      %s57 = sshll.u32 %s13, 4
      %s58 = int_to_ptr.hbm [resolvable:$true] %s57
      %s59 = sshll.u32 [#allocation2], 4
      %s60 = int_to_ptr.vmem [resolvable:$true] %s59
      %65 = dma.hbm_to_vmem [thread:$0]  %s58, 16384, %s60, [#allocation3], 256, 256, 16
    $region57: #{tpu_custom_call.1} parent=1 // pred_fallthru
      _
    // Predicated region
    $region58: #{tpu_custom_call.1} parent=1 // pred_check
      _
    $region59: #{tpu_custom_call.1} parent=1 // pred_check_branch
      %67 = sbr.rel (0) target = $region61
    $region60: #{tpu_custom_call.1} parent=1 // pred_region
      _
    $region61: #{tpu_custom_call.1} parent=1 // pred_fallthru
      _
    // Predicated region
    $region62: #{tpu_custom_call.1} parent=1 // pred_check
      _
    $region63: #{tpu_custom_call.1} parent=1 // pred_check_branch
      %69 = sbr.rel (0) target = $region65
    $region64: #{tpu_custom_call.1} parent=1 // pred_region
      %71 = vsyncadd [#allocation6], 0
      %s72 = sshll.u32 %s15, 4
      %s73 = int_to_ptr.hbm [resolvable:$true] %s72
      %s74 = sshll.u32 [#allocation5], 4
      %s75 = int_to_ptr.vmem [resolvable:$true] %s74
      %80 = dma.hbm_to_vmem [thread:$0]  %s73, 16384, %s75, [#allocation6], 256, 256, 16
    $region65: #{tpu_custom_call.1} parent=1 // pred_fallthru
      _
    // Predicated region
    $region66: #{tpu_custom_call.1} parent=1 // pred_check
      _
    $region67: #{tpu_custom_call.1} parent=1 // pred_check_branch
      %82 = sbr.rel (0) target = $region69
    $region68: #{tpu_custom_call.1} parent=1 // pred_region
      _
    $region69: #{tpu_custom_call.1} parent=1 // pred_fallthru
      _
    // Predicated region
    $region70: #{tpu_custom_call.1} parent=1 // pred_check
      _
    $region71: #{tpu_custom_call.1} parent=1 // pred_check_branch
      %84 = sbr.rel (0) target = $region73
    $region72: #{tpu_custom_call.1} parent=1 // pred_region
      _
    $region73: #{tpu_custom_call.1} parent=1 // pred_fallthru
      _
    // Predicated region
    $region74: #{tpu_custom_call.1} parent=1 // pred_check
      _
    $region75: #{tpu_custom_call.1} parent=1 // pred_check_branch
      %86 = sbr.rel (0) target = $region77
    $region76: #{tpu_custom_call.1} parent=1 // pred_region
      _
    $region77: #{tpu_custom_call.1} parent=1 // pred_fallthru
      _
    // Predicated region
    $region78: #{tpu_custom_call.1} parent=1 // pred_check
      _
    $region79: #{tpu_custom_call.1} parent=1 // pred_check_branch
      %88 = sbr.rel (0) target = $region81
    $region80: #{tpu_custom_call.1} parent=1 // pred_region
      %90 = dma.done [#allocation3], 16384
    $region81: #{tpu_custom_call.1} parent=1 // pred_fallthru
      _
    // Predicated region
    $region82: #{tpu_custom_call.1} parent=1 // pred_check
      _
    $region83: #{tpu_custom_call.1} parent=1 // pred_check_branch
      %92 = sbr.rel (0) target = $region85
    $region84: #{tpu_custom_call.1} parent=1 // pred_region
      %94 = dma.done [#allocation6], 16384
    $region85: #{tpu_custom_call.1} parent=1 // pred_fallthru
      _
    %v97 = vld [vmem:[%s1] sm:$0xff]
    %v98 = vld [vmem:[%s2] sm:$0x1]
    %100 = vset.pattern.permute.xlu0 0
    %101 = vperm.xlu0 %100, %v97
    %v102 = vpop.permute.xlu0 %101
    %v105 = vperm.slane %v98, 0
    %v107 = vmul.f32 %v102, %v105
    %v108 = vld [vmem:[%s3] sm:$0x1]
    %v110 = vperm.slane %v108, 0
    %v112 = vadd.f32 %v107, %v110
    %v113 = vpack.c.bf16 %v112, %v112
    %v114 = vxor.u32 %v113, 2147516416
    %v115 = vunpack.c.l.bf16 %v114
    %v116 = vmul.f32 %v115, 1.442695
    %v117 = vpow.pop %v116
    %v118 = vpack.c.bf16 %v117, %v117
    %v119 = vunpack.c.l.bf16 %v118
    %v120 = vadd.f32 %v119, 1.0
    %v121 = vpack.c.bf16 %v120, %v120
    %v122 = vunpack.c.h.bf16 1065369472
    %v123 = vunpack.c.l.bf16 1065369472
    %v124 = vunpack.c.h.bf16 %v121
    %v125 = vunpack.c.l.bf16 %v121
    %v126 = vrcp.pop %v124
    %v127 = vmul.f32 %v122, %v126
    %v128 = vrcp.pop %v125
    %v129 = vmul.f32 %v123, %v128
    %v130 = vpack.c.bf16 %v127, %v129
    %v131 = vunpack.c.l.bf16 %v113
    %v132 = vunpack.c.l.bf16 %v130
    %v133 = vmul.f32 %v131, %v132
    %v134 = vpack.c.bf16 %v133, %v133
    %v135 = vld [vmem:[%s4] sm:$0xf]
    %v136 = vld [vmem:[%s4 + $0x4] sm:$0xf]
    %v137 = vld [vmem:[%s4 + $0x8] sm:$0xf]
    %v138 = vld [vmem:[%s4 + $0xc] sm:$0xf]
    %v139 = vld [vmem:[%s4 + $0x10] sm:$0xf]
    %v140 = vld [vmem:[%s4 + $0x14] sm:$0xf]
    %v141 = vld [vmem:[%s4 + $0x18] sm:$0xf]
    %v142 = vld [vmem:[%s4 + $0x1c] sm:$0xf]
    %v143 = vld [vmem:[%s5] sm:$0x1]
    %v145 = vperm.slane %v143, 0
    %v155 = vunpack.c.l.b16 %v135
    %v156 = vunpack.c.l.b16 %v136
    %v157 = vunpack.c.l.b16 %v137
    %v158 = vunpack.c.l.b16 %v138
    %v159 = vunpack.c.l.b16 %v139
    %v160 = vunpack.c.l.b16 %v140
    %v161 = vunpack.c.l.b16 %v141
    %v162 = vunpack.c.l.b16 %v142
    %v163 = vpack.c.b16 %v156, %v155
    %v164 = vpack.c.b16 %v158, %v157
    %v165 = vpack.c.b16 %v160, %v159
    %v166 = vpack.c.b16 %v162, %v161
    %vm171 = vcmask 523264
    %v173 = vsel %vm171, %v134, 0
    %175 = vmatpush.bf16.msra.mxu0 0
    %176 = vmatpush.bf16.msra.mxu0 0
    %177 = vmatpush.bf16.msra.mxu0 0
    %178 = vmatpush.bf16.msra.mxu0 0
    %179 = vmatpush.bf16.msra.mxu0 %v166
    %180 = vmatpush.bf16.msra.mxu0 %v165
    %181 = vmatpush.bf16.msra.mxu0 %v164
    %182 = vmatpush.bf16.msra.mxu0 %v163
    %183 = vmatmul.bf16.gmra.mxu0 %v173
    %v184 = vpop.f32.mrf.mxu0
    %v185 = vadd.f32 %v145, %v184
    %v186 = vpop.f32.mrf.mxu0
    %187 = vdwg.mxu0
    %v188 = vld [vmem:[%s0] sm:$0xff]
    %vm189 = vcmask 113664
    %v190 = vsel %vm189, %v188, 0.0
    %191 = vadd.xlane.f32.xlu0 %v190
    %v192 = vpop.xlane.xlu0 %191
    %v193 = vsel %vm171, %v185, 0.0
    %194 = vadd.xlane.f32.xlu0 %v193
    %v195 = vpop.xlane.xlu0 %194
    %v196 = vadd.f32 %v192, %v195
    %v197 = vmul.f32 %v196, 0.012820513
    %v198 = vsub.f32 %v188, %v197
    %v199 = vsub.f32 %v185, %v197
    %v200 = vmul.f32 %v198, %v198
    %v201 = vsel %vm189, %v200, 0.0
    %202 = vadd.xlane.f32.xlu0 %v201
    %v203 = vpop.xlane.xlu0 %202
    %v204 = vmul.f32 %v199, %v199
    %v205 = vsel %vm171, %v204, 0.0
    %206 = vadd.xlane.f32.xlu0 %v205
    %v207 = vpop.xlane.xlu0 %206
    %v208 = vadd.f32 %v203, %v207
    %v209 = vmul.f32 %v208, 0.012820513
    %v210 = vadd.f32 %v209, 1e-05
    %v211 = vrsqrt.pop %v210
    %v212 = vmul.f32 %v211, %v210
    %v213 = vmul.f32 %v212, %v211
    %v214 = vmul.f32 0.5, %v213
    %v215 = vsub.f32 1.5, %v214
    %v216 = vmul.f32 %v211, %v215
    %vm217 = vweird.f32 %v210
    %vm218 = vweird.f32 %v211
    %vm219 = vmor %vm217, %vm218
    %v220 = vsel %vm219, %v211, %v216
    %v221 = vmul.f32 %v198, %v220
    %v222 = vld [vmem:[%s6] sm:$0x1]
    %v224 = vperm.slane %v222, 0
    %v226 = vmul.f32 %v221, %v224
    %v227 = vld [vmem:[%s8] sm:$0x1]
    %v229 = vperm.slane %v227, 0
    %v231 = vadd.f32 %v226, %v229
    %v232 = vmul.f32 %v199, %v220
    %v233 = vld [vmem:[%s7] sm:$0x1]
    %v235 = vperm.slane %v233, 0
    %v237 = vmul.f32 %v232, %v235
    %v238 = vld [vmem:[%s9] sm:$0x1]
    %v240 = vperm.slane %v238, 0
    %v242 = vadd.f32 %v237, %v240
    %v243 = vpack.c.bf16 %v231, %v231
    %v244 = vld [vmem:[%s10] sm:$0xff]
    %v245 = vld [vmem:[%s10 + $0x8] sm:$0xff]
    %v246 = vld [vmem:[%s10 + $0x10] sm:$0x77]
    %v247 = vld [vmem:[%s10 + $0x18] sm:$0x77]
    %v248 = vpack.c.bf16 %v242, %v242
    %v249 = vld [vmem:[%s11] sm:$0xff]
    %v250 = vld [vmem:[%s11 + $0x8] sm:$0xff]
    %v251 = vld [vmem:[%s11 + $0x10] sm:$0xff]
    %v252 = vld [vmem:[%s11 + $0x18] sm:$0xff]
    %v253 = vld [vmem:[%s11 + $0x20] sm:$0xff]
    %v254 = vld [vmem:[%s11 + $0x28] sm:$0xff]
    %v255 = vld [vmem:[%s11 + $0x30] sm:$0xff]
    %v256 = vld [vmem:[%s11 + $0x38] sm:$0xff]
    %v257 = vld [vmem:[%s11 + $0x40] sm:$0xff]
    %v258 = vld [vmem:[%s11 + $0x48] sm:$0xff]
    %v259 = vld [vmem:[%s11 + $0x50] sm:$0xff]
    %v260 = vld [vmem:[%s11 + $0x58] sm:$0xff]
    %v261 = vld [vmem:[%s11 + $0x60] sm:$0xff]
    %v262 = vld [vmem:[%s11 + $0x68] sm:$0xff]
    %v263 = vld [vmem:[%s11 + $0x70] sm:$0xff]
    %v264 = vld [vmem:[%s11 + $0x78] sm:$0xff]
    %v281 = vunpack.c.l.b16 %v249
    %v282 = vunpack.c.h.b16 %v249
    %v283 = vunpack.c.l.b16 %v250
    %v284 = vunpack.c.h.b16 %v250
    %v285 = vunpack.c.l.b16 %v251
    %v286 = vunpack.c.h.b16 %v251
    %v287 = vunpack.c.l.b16 %v252
    %v288 = vunpack.c.h.b16 %v252
    %v289 = vunpack.c.l.b16 %v253
    %v290 = vunpack.c.h.b16 %v253
    %v291 = vunpack.c.l.b16 %v254
    %v292 = vunpack.c.h.b16 %v254
    %v293 = vunpack.c.l.b16 %v255
    %v294 = vunpack.c.h.b16 %v255
    %v295 = vunpack.c.l.b16 %v256
    %v296 = vunpack.c.h.b16 %v256
    %v297 = vunpack.c.l.b16 %v257
    %v298 = vunpack.c.h.b16 %v257
    %v299 = vunpack.c.l.b16 %v258
    %v300 = vunpack.c.h.b16 %v258
    %v301 = vunpack.c.l.b16 %v259
    %v302 = vunpack.c.h.b16 %v259
    %v303 = vunpack.c.l.b16 %v260
    %v304 = vunpack.c.h.b16 %v260
    %v305 = vunpack.c.l.b16 %v261
    %v306 = vunpack.c.h.b16 %v261
    %v307 = vunpack.c.l.b16 %v262
    %v308 = vunpack.c.h.b16 %v262
    %v309 = vunpack.c.l.b16 %v263
    %v310 = vunpack.c.h.b16 %v263
    %v311 = vunpack.c.l.b16 %v264
    %v312 = vunpack.c.h.b16 %v264
    %v313 = vpack.c.b16 %v285, %v281
    %v314 = vpack.c.b16 %v286, %v282
    %v315 = vpack.c.b16 %v287, %v283
    %v316 = vpack.c.b16 %v288, %v284
    %v317 = vpack.c.b16 %v293, %v289
    %v318 = vpack.c.b16 %v294, %v290
    %v319 = vpack.c.b16 %v295, %v291
    %v320 = vpack.c.b16 %v296, %v292
    %v321 = vpack.c.b16 %v301, %v297
    %v322 = vpack.c.b16 %v302, %v298
    %v323 = vpack.c.b16 %v303, %v299
    %v324 = vpack.c.b16 %v304, %v300
    %v325 = vpack.c.b16 %v309, %v305
    %v326 = vpack.c.b16 %v310, %v306
    %v327 = vpack.c.b16 %v311, %v307
    %v328 = vpack.c.b16 %v312, %v308
    %v346 = vsel %vm171, %v248, 0
    %348 = vmatpush.bf16.msra.mxu0 0
    %349 = vmatpush.bf16.msra.mxu0 0
    %350 = vmatpush.bf16.msra.mxu0 0
    %351 = vmatpush.bf16.msra.mxu0 0
    %352 = vmatpush.bf16.msra.mxu0 %v325
    %353 = vmatpush.bf16.msra.mxu0 %v321
    %354 = vmatpush.bf16.msra.mxu0 %v317
    %355 = vmatpush.bf16.msra.mxu0 %v313
    %356 = vmatmul.bf16.gmra.mxu0 %v346
    %v357 = vpop.f32.mrf.mxu0
    %v358 = vadd.f32 0.0, %v357
    %v359 = vpop.f32.mrf.mxu0
    %360 = vdwg.mxu0
    %361 = vmatpush.bf16.msra.mxu0 0
    %362 = vmatpush.bf16.msra.mxu0 0
    %363 = vmatpush.bf16.msra.mxu0 0
    %364 = vmatpush.bf16.msra.mxu0 0
    %365 = vmatpush.bf16.msra.mxu0 %v326
    %366 = vmatpush.bf16.msra.mxu0 %v322
    %367 = vmatpush.bf16.msra.mxu0 %v318
    %368 = vmatpush.bf16.msra.mxu0 %v314
    %369 = vmatmul.bf16.gmra.mxu0 %v346
    %v370 = vpop.f32.mrf.mxu0
    %v371 = vadd.f32 0.0, %v370
    %v372 = vpop.f32.mrf.mxu0
    %373 = vdwg.mxu0
    %374 = vmatpush.bf16.msra.mxu0 0
    %375 = vmatpush.bf16.msra.mxu0 0
    %376 = vmatpush.bf16.msra.mxu0 0
    %377 = vmatpush.bf16.msra.mxu0 0
    %378 = vmatpush.bf16.msra.mxu0 %v327
    %379 = vmatpush.bf16.msra.mxu0 %v323
    %380 = vmatpush.bf16.msra.mxu0 %v319
    %381 = vmatpush.bf16.msra.mxu0 %v315
    %382 = vmatmul.bf16.gmra.mxu0 %v346
    %v383 = vpop.f32.mrf.mxu0
    %v384 = vadd.f32 0.0, %v383
    %v385 = vpop.f32.mrf.mxu0
    %386 = vdwg.mxu0
    %387 = vmatpush.bf16.msra.mxu0 0
    %388 = vmatpush.bf16.msra.mxu0 0
    %389 = vmatpush.bf16.msra.mxu0 0
    %390 = vmatpush.bf16.msra.mxu0 0
    %391 = vmatpush.bf16.msra.mxu0 %v328
    %392 = vmatpush.bf16.msra.mxu0 %v324
    %393 = vmatpush.bf16.msra.mxu0 %v320
    %394 = vmatpush.bf16.msra.mxu0 %v316
    %395 = vmatmul.bf16.gmra.mxu0 %v346
    %v396 = vpop.f32.mrf.mxu0
    %v397 = vadd.f32 0.0, %v396
    %v398 = vpop.f32.mrf.mxu0
    %399 = vdwg.mxu0
    %v404 = vunpack.c.l.b16 %v244
    %v405 = vunpack.c.h.b16 %v244
    %v406 = vunpack.c.l.b16 %v245
    %v407 = vunpack.c.h.b16 %v245
    %v408 = vunpack.c.l.b16 %v246
    %v409 = vunpack.c.h.b16 %v246
    %v410 = vunpack.c.l.b16 %v247
    %v411 = vunpack.c.h.b16 %v247
    %v412 = vpack.c.b16 %v408, %v404
    %v413 = vpack.c.b16 %v409, %v405
    %v414 = vpack.c.b16 %v410, %v406
    %v415 = vpack.c.b16 %v411, %v407
    %v417 = vsel %vm189, %v243, 0
    %vm419 = vcmask 1046528
    %v421 = vsel %vm419, %v412, 0
    %v424 = vsel %vm419, %v413, 0
    %v427 = vsel %vm419, %v414, 0
    %v430 = vsel %vm419, %v415, 0
    %432 = vmatpush.bf16.msra.mxu0 0
    %433 = vmatpush.bf16.msra.mxu0 0
    %434 = vmatpush.bf16.msra.mxu0 0
    %435 = vmatpush.bf16.msra.mxu0 0
    %436 = vmatpush.bf16.msra.mxu0 0
    %437 = vmatpush.bf16.msra.mxu0 0
    %438 = vmatpush.bf16.msra.mxu0 0
    %439 = vmatpush.bf16.msra.mxu0 %v421
    %440 = vmatmul.bf16.gmra.mxu0 %v417
    %v441 = vpop.f32.mrf.mxu0
    %v442 = vadd.f32 %v358, %v441
    %v443 = vpop.f32.mrf.mxu0
    %444 = vdwg.mxu0
    %445 = vmatpush.bf16.msra.mxu0 0
    %446 = vmatpush.bf16.msra.mxu0 0
    %447 = vmatpush.bf16.msra.mxu0 0
    %448 = vmatpush.bf16.msra.mxu0 0
    %449 = vmatpush.bf16.msra.mxu0 0
    %450 = vmatpush.bf16.msra.mxu0 0
    %451 = vmatpush.bf16.msra.mxu0 0
    %452 = vmatpush.bf16.msra.mxu0 %v424
    %453 = vmatmul.bf16.gmra.mxu0 %v417
    %v454 = vpop.f32.mrf.mxu0
    %v455 = vadd.f32 %v371, %v454
    %v456 = vpop.f32.mrf.mxu0
    %457 = vdwg.mxu0
    %458 = vmatpush.bf16.msra.mxu0 0
    %459 = vmatpush.bf16.msra.mxu0 0
    %460 = vmatpush.bf16.msra.mxu0 0
    %461 = vmatpush.bf16.msra.mxu0 0
    %462 = vmatpush.bf16.msra.mxu0 0
    %463 = vmatpush.bf16.msra.mxu0 0
    %464 = vmatpush.bf16.msra.mxu0 0
    %465 = vmatpush.bf16.msra.mxu0 %v427
    %466 = vmatmul.bf16.gmra.mxu0 %v417
    %v467 = vpop.f32.mrf.mxu0
    %v468 = vadd.f32 %v384, %v467
    %v469 = vpop.f32.mrf.mxu0
    %470 = vdwg.mxu0
    %471 = vmatpush.bf16.msra.mxu0 0
    %472 = vmatpush.bf16.msra.mxu0 0
    %473 = vmatpush.bf16.msra.mxu0 0
    %474 = vmatpush.bf16.msra.mxu0 0
    %475 = vmatpush.bf16.msra.mxu0 0
    %476 = vmatpush.bf16.msra.mxu0 0
    %477 = vmatpush.bf16.msra.mxu0 0
    %478 = vmatpush.bf16.msra.mxu0 %v430
    %479 = vmatmul.bf16.gmra.mxu0 %v417
    %v480 = vpop.f32.mrf.mxu0
    %v481 = vadd.f32 %v397, %v480
    %v482 = vpop.f32.mrf.mxu0
    %483 = vdwg.mxu0
    %v484 = vld [vmem:[%s12] sm:$0xf]
    %v486 = vperm.slane %v484, 0
    %v487 = vperm.slane %v484, 1
    %v488 = vperm.slane %v484, 2
    %v489 = vperm.slane %v484, 3
    %v494 = vadd.f32 %v442, %v486
    %v495 = vadd.f32 %v455, %v487
    %v496 = vadd.f32 %v468, %v488
    %v497 = vadd.f32 %v481, %v489
    %v498 = vpack.c.bf16 %v495, %v494
    %v499 = vpack.c.bf16 %v497, %v496
    %v500 = vxor.u32 %v498, 2147516416
    %v501 = vxor.u32 %v499, 2147516416
    %v502 = vunpack.c.l.bf16 %v500
    %v503 = vunpack.c.h.bf16 %v500
    %v504 = vunpack.c.l.bf16 %v501
    %v505 = vunpack.c.h.bf16 %v501
    %v506 = vmul.f32 %v502, 1.442695
    %v507 = vpow.pop %v506
    %v508 = vmul.f32 %v503, 1.442695
    %v509 = vpow.pop %v508
    %v510 = vmul.f32 %v504, 1.442695
    %v511 = vpow.pop %v510
    %v512 = vmul.f32 %v505, 1.442695
    %v513 = vpow.pop %v512
    %v514 = vpack.c.bf16 %v509, %v507
    %v515 = vpack.c.bf16 %v513, %v511
    %v516 = vunpack.c.l.bf16 %v514
    %v517 = vunpack.c.h.bf16 %v514
    %v518 = vunpack.c.l.bf16 %v515
    %v519 = vunpack.c.h.bf16 %v515
    %v520 = vadd.f32 %v516, 1.0
    %v521 = vadd.f32 %v517, 1.0
    %v522 = vadd.f32 %v518, 1.0
    %v523 = vadd.f32 %v519, 1.0
    %v524 = vpack.c.bf16 %v521, %v520
    %v525 = vpack.c.bf16 %v523, %v522
    %v526 = vunpack.c.h.bf16 %v524
    %v527 = vunpack.c.l.bf16 %v524
    %v528 = vrcp.pop %v526
    %v529 = vmul.f32 %v122, %v528
    %v530 = vrcp.pop %v527
    %v531 = vmul.f32 %v123, %v530
    %v532 = vpack.c.bf16 %v529, %v531
    %v533 = vunpack.c.h.bf16 %v525
    %v534 = vunpack.c.l.bf16 %v525
    %v535 = vrcp.pop %v533
    %v536 = vmul.f32 %v122, %v535
    %v537 = vrcp.pop %v534
    %v538 = vmul.f32 %v123, %v537
    %v539 = vpack.c.bf16 %v536, %v538
    %v540 = vunpack.c.l.bf16 %v498
    %v541 = vunpack.c.h.bf16 %v498
    %v542 = vunpack.c.l.bf16 %v499
    %v543 = vunpack.c.h.bf16 %v499
    %v544 = vunpack.c.l.bf16 %v532
    %v545 = vunpack.c.h.bf16 %v532
    %v546 = vunpack.c.l.bf16 %v539
    %v547 = vunpack.c.h.bf16 %v539
    %v548 = vmul.f32 %v540, %v544
    %v549 = vmul.f32 %v541, %v545
    %v550 = vmul.f32 %v542, %v546
    %v551 = vmul.f32 %v543, %v547
    %v552 = vpack.c.bf16 %v548, %v548
    %v553 = vpack.c.bf16 %v549, %v549
    %v554 = vpack.c.bf16 %v550, %v550
    %v555 = vpack.c.bf16 %v551, %v551
    %v556 = vld [vmem:[#allocation2] sm:$0xff]
    %v557 = vld [vmem:[#allocation2 + $0x8] sm:$0xff]
    %v558 = vld [vmem:[#allocation2 + $0x10] sm:$0xff]
    %v559 = vld [vmem:[#allocation2 + $0x18] sm:$0xff]
    %v560 = vld [vmem:[#allocation2 + $0x20] sm:$0xff]
    %v561 = vld [vmem:[#allocation2 + $0x28] sm:$0xff]
    %v562 = vld [vmem:[#allocation2 + $0x30] sm:$0xff]
    %v563 = vld [vmem:[#allocation2 + $0x38] sm:$0xff]
    %v564 = vld [vmem:[#allocation2 + $0x40] sm:$0xff]
    %v565 = vld [vmem:[#allocation2 + $0x48] sm:$0xff]
    %v566 = vld [vmem:[#allocation2 + $0x50] sm:$0xff]
    %v567 = vld [vmem:[#allocation2 + $0x58] sm:$0xff]
    %v568 = vld [vmem:[#allocation2 + $0x60] sm:$0xff]
    %v569 = vld [vmem:[#allocation2 + $0x68] sm:$0xff]
    %v570 = vld [vmem:[#allocation2 + $0x70] sm:$0xff]
    %v571 = vld [vmem:[#allocation2 + $0x78] sm:$0xff]
    %v572 = vld [vmem:[#allocation2 + $0x80] sm:$0xff]
    %v573 = vld [vmem:[#allocation2 + $0x88] sm:$0xff]
    %v574 = vld [vmem:[#allocation2 + $0x90] sm:$0xff]
    %v575 = vld [vmem:[#allocation2 + $0x98] sm:$0xff]
    %v576 = vld [vmem:[#allocation2 + $0xa0] sm:$0xff]
    %v577 = vld [vmem:[#allocation2 + $0xa8] sm:$0xff]
    %v578 = vld [vmem:[#allocation2 + $0xb0] sm:$0xff]
    %v579 = vld [vmem:[#allocation2 + $0xb8] sm:$0xff]
    %v580 = vld [vmem:[#allocation2 + $0xc0] sm:$0xff]
    %v581 = vld [vmem:[#allocation2 + $0xc8] sm:$0xff]
    %v582 = vld [vmem:[#allocation2 + $0xd0] sm:$0xff]
    %v583 = vld [vmem:[#allocation2 + $0xd8] sm:$0xff]
    %v584 = vld [vmem:[#allocation2 + $0xe0] sm:$0xff]
    %v585 = vld [vmem:[#allocation2 + $0xe8] sm:$0xff]
    %v586 = vld [vmem:[#allocation2 + $0xf0] sm:$0xff]
    %v587 = vld [vmem:[#allocation2 + $0xf8] sm:$0xff]
    %v588 = vld [vmem:[#allocation2 + $0x100] sm:$0xff]
    %v589 = vld [vmem:[#allocation2 + $0x108] sm:$0xff]
    %v590 = vld [vmem:[#allocation2 + $0x110] sm:$0xff]
    %v591 = vld [vmem:[#allocation2 + $0x118] sm:$0xff]
    %v592 = vld [vmem:[#allocation2 + $0x120] sm:$0xff]
    %v593 = vld [vmem:[#allocation2 + $0x128] sm:$0xff]
    %v594 = vld [vmem:[#allocation2 + $0x130] sm:$0xff]
    %v595 = vld [vmem:[#allocation2 + $0x138] sm:$0xff]
    %v596 = vld [vmem:[#allocation2 + $0x140] sm:$0xff]
    %v597 = vld [vmem:[#allocation2 + $0x148] sm:$0xff]
    %v598 = vld [vmem:[#allocation2 + $0x150] sm:$0xff]
    %v599 = vld [vmem:[#allocation2 + $0x158] sm:$0xff]
    %v600 = vld [vmem:[#allocation2 + $0x160] sm:$0xff]
    %v601 = vld [vmem:[#allocation2 + $0x168] sm:$0xff]
    %v602 = vld [vmem:[#allocation2 + $0x170] sm:$0xff]
    %v603 = vld [vmem:[#allocation2 + $0x178] sm:$0xff]
    %v604 = vld [vmem:[#allocation2 + $0x180] sm:$0xff]
    %v605 = vld [vmem:[#allocation2 + $0x188] sm:$0xff]
    %v606 = vld [vmem:[#allocation2 + $0x190] sm:$0xff]
    %v607 = vld [vmem:[#allocation2 + $0x198] sm:$0xff]
    %v608 = vld [vmem:[#allocation2 + $0x1a0] sm:$0xff]
    %v609 = vld [vmem:[#allocation2 + $0x1a8] sm:$0xff]
    %v610 = vld [vmem:[#allocation2 + $0x1b0] sm:$0xff]
    %v611 = vld [vmem:[#allocation2 + $0x1b8] sm:$0xff]
    %v612 = vld [vmem:[#allocation2 + $0x1c0] sm:$0xff]
    %v613 = vld [vmem:[#allocation2 + $0x1c8] sm:$0xff]
    %v614 = vld [vmem:[#allocation2 + $0x1d0] sm:$0xff]
    %v615 = vld [vmem:[#allocation2 + $0x1d8] sm:$0xff]
    %v616 = vld [vmem:[#allocation2 + $0x1e0] sm:$0xff]
    %v617 = vld [vmem:[#allocation2 + $0x1e8] sm:$0xff]
    %v618 = vld [vmem:[#allocation2 + $0x1f0] sm:$0xff]
    %v619 = vld [vmem:[#allocation2 + $0x1f8] sm:$0xff]
    %v620 = vld [vmem:[#allocation2 + $0x200] sm:$0xff]
    %v621 = vld [vmem:[#allocation2 + $0x208] sm:$0xff]
    %v622 = vld [vmem:[#allocation2 + $0x210] sm:$0xff]
    %v623 = vld [vmem:[#allocation2 + $0x218] sm:$0xff]
    %v624 = vld [vmem:[#allocation2 + $0x220] sm:$0xff]
    %v625 = vld [vmem:[#allocation2 + $0x228] sm:$0xff]
    %v626 = vld [vmem:[#allocation2 + $0x230] sm:$0xff]
    %v627 = vld [vmem:[#allocation2 + $0x238] sm:$0xff]
    %v628 = vld [vmem:[#allocation2 + $0x240] sm:$0xff]
    %v629 = vld [vmem:[#allocation2 + $0x248] sm:$0xff]
    %v630 = vld [vmem:[#allocation2 + $0x250] sm:$0xff]
    %v631 = vld [vmem:[#allocation2 + $0x258] sm:$0xff]
    %v632 = vld [vmem:[#allocation2 + $0x260] sm:$0xff]
    %v633 = vld [vmem:[#allocation2 + $0x268] sm:$0xff]
    %v634 = vld [vmem:[#allocation2 + $0x270] sm:$0xff]
    %v635 = vld [vmem:[#allocation2 + $0x278] sm:$0xff]
    %v636 = vld [vmem:[#allocation2 + $0x280] sm:$0xff]
    %v637 = vld [vmem:[#allocation2 + $0x288] sm:$0xff]
    %v638 = vld [vmem:[#allocation2 + $0x290] sm:$0xff]
    %v639 = vld [vmem:[#allocation2 + $0x298] sm:$0xff]
    %v640 = vld [vmem:[#allocation2 + $0x2a0] sm:$0xff]
    %v641 = vld [vmem:[#allocation2 + $0x2a8] sm:$0xff]
    %v642 = vld [vmem:[#allocation2 + $0x2b0] sm:$0xff]
    %v643 = vld [vmem:[#allocation2 + $0x2b8] sm:$0xff]
    %v644 = vld [vmem:[#allocation2 + $0x2c0] sm:$0xff]
    %v645 = vld [vmem:[#allocation2 + $0x2c8] sm:$0xff]
    %v646 = vld [vmem:[#allocation2 + $0x2d0] sm:$0xff]
    %v647 = vld [vmem:[#allocation2 + $0x2d8] sm:$0xff]
    %v648 = vld [vmem:[#allocation2 + $0x2e0] sm:$0xff]
    %v649 = vld [vmem:[#allocation2 + $0x2e8] sm:$0xff]
    %v650 = vld [vmem:[#allocation2 + $0x2f0] sm:$0xff]
    %v651 = vld [vmem:[#allocation2 + $0x2f8] sm:$0xff]
    %v652 = vld [vmem:[#allocation2 + $0x300] sm:$0xff]
    %v653 = vld [vmem:[#allocation2 + $0x308] sm:$0xff]
    %v654 = vld [vmem:[#allocation2 + $0x310] sm:$0xff]
    %v655 = vld [vmem:[#allocation2 + $0x318] sm:$0xff]
    %v656 = vld [vmem:[#allocation2 + $0x320] sm:$0xff]
    %v657 = vld [vmem:[#allocation2 + $0x328] sm:$0xff]
    %v658 = vld [vmem:[#allocation2 + $0x330] sm:$0xff]
    %v659 = vld [vmem:[#allocation2 + $0x338] sm:$0xff]
    %v660 = vld [vmem:[#allocation2 + $0x340] sm:$0xff]
    %v661 = vld [vmem:[#allocation2 + $0x348] sm:$0xff]
    %v662 = vld [vmem:[#allocation2 + $0x350] sm:$0xff]
    %v663 = vld [vmem:[#allocation2 + $0x358] sm:$0xff]
    %v664 = vld [vmem:[#allocation2 + $0x360] sm:$0xff]
    %v665 = vld [vmem:[#allocation2 + $0x368] sm:$0xff]
    %v666 = vld [vmem:[#allocation2 + $0x370] sm:$0xff]
    %v667 = vld [vmem:[#allocation2 + $0x378] sm:$0xff]
    %v668 = vld [vmem:[#allocation2 + $0x380] sm:$0xff]
    %v669 = vld [vmem:[#allocation2 + $0x388] sm:$0xff]
    %v670 = vld [vmem:[#allocation2 + $0x390] sm:$0xff]
    %v671 = vld [vmem:[#allocation2 + $0x398] sm:$0xff]
    %v672 = vld [vmem:[#allocation2 + $0x3a0] sm:$0xff]
    %v673 = vld [vmem:[#allocation2 + $0x3a8] sm:$0xff]
    %v674 = vld [vmem:[#allocation2 + $0x3b0] sm:$0xff]
    %v675 = vld [vmem:[#allocation2 + $0x3b8] sm:$0xff]
    %v676 = vld [vmem:[#allocation2 + $0x3c0] sm:$0xff]
    %v677 = vld [vmem:[#allocation2 + $0x3c8] sm:$0xff]
    %v678 = vld [vmem:[#allocation2 + $0x3d0] sm:$0xff]
    %v679 = vld [vmem:[#allocation2 + $0x3d8] sm:$0xff]
    %v680 = vld [vmem:[#allocation2 + $0x3e0] sm:$0xff]
    %v681 = vld [vmem:[#allocation2 + $0x3e8] sm:$0xff]
    %v682 = vld [vmem:[#allocation2 + $0x3f0] sm:$0xff]
    %v683 = vld [vmem:[#allocation2 + $0x3f8] sm:$0xff]
    %v684 = vld [vmem:[%s14] sm:$0xf]
    %v686 = vperm.slane %v684, 0
    %v687 = vperm.slane %v684, 1
    %v688 = vperm.slane %v684, 2
    %v689 = vperm.slane %v684, 3
    %v822 = vunpack.c.l.b16 %v556
    %v823 = vunpack.c.h.b16 %v556
    %v824 = vunpack.c.l.b16 %v557
    %v825 = vunpack.c.h.b16 %v557
    %v826 = vunpack.c.l.b16 %v558
    %v827 = vunpack.c.h.b16 %v558
    %v828 = vunpack.c.l.b16 %v559
    %v829 = vunpack.c.h.b16 %v559
    %v830 = vunpack.c.l.b16 %v560
    %v831 = vunpack.c.h.b16 %v560
    %v832 = vunpack.c.l.b16 %v561
    %v833 = vunpack.c.h.b16 %v561
    %v834 = vunpack.c.l.b16 %v562
    %v835 = vunpack.c.h.b16 %v562
    %v836 = vunpack.c.l.b16 %v563
    %v837 = vunpack.c.h.b16 %v563
    %v838 = vunpack.c.l.b16 %v564
    %v839 = vunpack.c.h.b16 %v564
    %v840 = vunpack.c.l.b16 %v565
    %v841 = vunpack.c.h.b16 %v565
    %v842 = vunpack.c.l.b16 %v566
    %v843 = vunpack.c.h.b16 %v566
    %v844 = vunpack.c.l.b16 %v567
    %v845 = vunpack.c.h.b16 %v567
    %v846 = vunpack.c.l.b16 %v568
    %v847 = vunpack.c.h.b16 %v568
    %v848 = vunpack.c.l.b16 %v569
    %v849 = vunpack.c.h.b16 %v569
    %v850 = vunpack.c.l.b16 %v570
    %v851 = vunpack.c.h.b16 %v570
    %v852 = vunpack.c.l.b16 %v571
    %v853 = vunpack.c.h.b16 %v571
    %v854 = vunpack.c.l.b16 %v572
    %v855 = vunpack.c.h.b16 %v572
    %v856 = vunpack.c.l.b16 %v573
    %v857 = vunpack.c.h.b16 %v573
    %v858 = vunpack.c.l.b16 %v574
    %v859 = vunpack.c.h.b16 %v574
    %v860 = vunpack.c.l.b16 %v575
    %v861 = vunpack.c.h.b16 %v575
    %v862 = vunpack.c.l.b16 %v576
    %v863 = vunpack.c.h.b16 %v576
    %v864 = vunpack.c.l.b16 %v577
    %v865 = vunpack.c.h.b16 %v577
    %v866 = vunpack.c.l.b16 %v578
    %v867 = vunpack.c.h.b16 %v578
    %v868 = vunpack.c.l.b16 %v579
    %v869 = vunpack.c.h.b16 %v579
    %v870 = vunpack.c.l.b16 %v580
    %v871 = vunpack.c.h.b16 %v580
    %v872 = vunpack.c.l.b16 %v581
    %v873 = vunpack.c.h.b16 %v581
    %v874 = vunpack.c.l.b16 %v582
    %v875 = vunpack.c.h.b16 %v582
    %v876 = vunpack.c.l.b16 %v583
    %v877 = vunpack.c.h.b16 %v583
    %v878 = vunpack.c.l.b16 %v584
    %v879 = vunpack.c.h.b16 %v584
    %v880 = vunpack.c.l.b16 %v585
    %v881 = vunpack.c.h.b16 %v585
    %v882 = vunpack.c.l.b16 %v586
    %v883 = vunpack.c.h.b16 %v586
    %v884 = vunpack.c.l.b16 %v587
    %v885 = vunpack.c.h.b16 %v587
    %v886 = vunpack.c.l.b16 %v588
    %v887 = vunpack.c.h.b16 %v588
    %v888 = vunpack.c.l.b16 %v589
    %v889 = vunpack.c.h.b16 %v589
    %v890 = vunpack.c.l.b16 %v590
    %v891 = vunpack.c.h.b16 %v590
    %v892 = vunpack.c.l.b16 %v591
    %v893 = vunpack.c.h.b16 %v591
    %v894 = vunpack.c.l.b16 %v592
    %v895 = vunpack.c.h.b16 %v592
    %v896 = vunpack.c.l.b16 %v593
    %v897 = vunpack.c.h.b16 %v593
    %v898 = vunpack.c.l.b16 %v594
    %v899 = vunpack.c.h.b16 %v594
    %v900 = vunpack.c.l.b16 %v595
    %v901 = vunpack.c.h.b16 %v595
    %v902 = vunpack.c.l.b16 %v596
    %v903 = vunpack.c.h.b16 %v596
    %v904 = vunpack.c.l.b16 %v597
    %v905 = vunpack.c.h.b16 %v597
    %v906 = vunpack.c.l.b16 %v598
    %v907 = vunpack.c.h.b16 %v598
    %v908 = vunpack.c.l.b16 %v599
    %v909 = vunpack.c.h.b16 %v599
    %v910 = vunpack.c.l.b16 %v600
    %v911 = vunpack.c.h.b16 %v600
    %v912 = vunpack.c.l.b16 %v601
    %v913 = vunpack.c.h.b16 %v601
    %v914 = vunpack.c.l.b16 %v602
    %v915 = vunpack.c.h.b16 %v602
    %v916 = vunpack.c.l.b16 %v603
    %v917 = vunpack.c.h.b16 %v603
    %v918 = vunpack.c.l.b16 %v604
    %v919 = vunpack.c.h.b16 %v604
    %v920 = vunpack.c.l.b16 %v605
    %v921 = vunpack.c.h.b16 %v605
    %v922 = vunpack.c.l.b16 %v606
    %v923 = vunpack.c.h.b16 %v606
    %v924 = vunpack.c.l.b16 %v607
    %v925 = vunpack.c.h.b16 %v607
    %v926 = vunpack.c.l.b16 %v608
    %v927 = vunpack.c.h.b16 %v608
    %v928 = vunpack.c.l.b16 %v609
    %v929 = vunpack.c.h.b16 %v609
    %v930 = vunpack.c.l.b16 %v610
    %v931 = vunpack.c.h.b16 %v610
    %v932 = vunpack.c.l.b16 %v611
    %v933 = vunpack.c.h.b16 %v611
    %v934 = vunpack.c.l.b16 %v612
    %v935 = vunpack.c.h.b16 %v612
    %v936 = vunpack.c.l.b16 %v613
    %v937 = vunpack.c.h.b16 %v613
    %v938 = vunpack.c.l.b16 %v614
    %v939 = vunpack.c.h.b16 %v614
    %v940 = vunpack.c.l.b16 %v615
    %v941 = vunpack.c.h.b16 %v615
    %v942 = vunpack.c.l.b16 %v616
    %v943 = vunpack.c.h.b16 %v616
    %v944 = vunpack.c.l.b16 %v617
    %v945 = vunpack.c.h.b16 %v617
    %v946 = vunpack.c.l.b16 %v618
    %v947 = vunpack.c.h.b16 %v618
    %v948 = vunpack.c.l.b16 %v619
    %v949 = vunpack.c.h.b16 %v619
    %v950 = vunpack.c.l.b16 %v620
    %v951 = vunpack.c.h.b16 %v620
    %v952 = vunpack.c.l.b16 %v621
    %v953 = vunpack.c.h.b16 %v621
    %v954 = vunpack.c.l.b16 %v622
    %v955 = vunpack.c.h.b16 %v622
    %v956 = vunpack.c.l.b16 %v623
    %v957 = vunpack.c.h.b16 %v623
    %v958 = vunpack.c.l.b16 %v624
    %v959 = vunpack.c.h.b16 %v624
    %v960 = vunpack.c.l.b16 %v625
    %v961 = vunpack.c.h.b16 %v625
    %v962 = vunpack.c.l.b16 %v626
    %v963 = vunpack.c.h.b16 %v626
    %v964 = vunpack.c.l.b16 %v627
    %v965 = vunpack.c.h.b16 %v627
    %v966 = vunpack.c.l.b16 %v628
    %v967 = vunpack.c.h.b16 %v628
    %v968 = vunpack.c.l.b16 %v629
    %v969 = vunpack.c.h.b16 %v629
    %v970 = vunpack.c.l.b16 %v630
    %v971 = vunpack.c.h.b16 %v630
    %v972 = vunpack.c.l.b16 %v631
    %v973 = vunpack.c.h.b16 %v631
    %v974 = vunpack.c.l.b16 %v632
    %v975 = vunpack.c.h.b16 %v632
    %v976 = vunpack.c.l.b16 %v633
    %v977 = vunpack.c.h.b16 %v633
    %v978 = vunpack.c.l.b16 %v634
    %v979 = vunpack.c.h.b16 %v634
    %v980 = vunpack.c.l.b16 %v635
    %v981 = vunpack.c.h.b16 %v635
    %v982 = vunpack.c.l.b16 %v636
    %v983 = vunpack.c.h.b16 %v636
    %v984 = vunpack.c.l.b16 %v637
    %v985 = vunpack.c.h.b16 %v637
    %v986 = vunpack.c.l.b16 %v638
    %v987 = vunpack.c.h.b16 %v638
    %v988 = vunpack.c.l.b16 %v639
    %v989 = vunpack.c.h.b16 %v639
    %v990 = vunpack.c.l.b16 %v640
    %v991 = vunpack.c.h.b16 %v640
    %v992 = vunpack.c.l.b16 %v641
    %v993 = vunpack.c.h.b16 %v641
    %v994 = vunpack.c.l.b16 %v642
    %v995 = vunpack.c.h.b16 %v642
    %v996 = vunpack.c.l.b16 %v643
    %v997 = vunpack.c.h.b16 %v643
    %v998 = vunpack.c.l.b16 %v644
    %v999 = vunpack.c.h.b16 %v644
    %v1000 = vunpack.c.l.b16 %v645
    %v1001 = vunpack.c.h.b16 %v645
    %v1002 = vunpack.c.l.b16 %v646
    %v1003 = vunpack.c.h.b16 %v646
    %v1004 = vunpack.c.l.b16 %v647
    %v1005 = vunpack.c.h.b16 %v647
    %v1006 = vunpack.c.l.b16 %v648
    %v1007 = vunpack.c.h.b16 %v648
    %v1008 = vunpack.c.l.b16 %v649
    %v1009 = vunpack.c.h.b16 %v649
    %v1010 = vunpack.c.l.b16 %v650
    %v1011 = vunpack.c.h.b16 %v650
    %v1012 = vunpack.c.l.b16 %v651
    %v1013 = vunpack.c.h.b16 %v651
    %v1014 = vunpack.c.l.b16 %v652
    %v1015 = vunpack.c.h.b16 %v652
    %v1016 = vunpack.c.l.b16 %v653
    %v1017 = vunpack.c.h.b16 %v653
    %v1018 = vunpack.c.l.b16 %v654
    %v1019 = vunpack.c.h.b16 %v654
    %v1020 = vunpack.c.l.b16 %v655
    %v1021 = vunpack.c.h.b16 %v655
    %v1022 = vunpack.c.l.b16 %v656
    %v1023 = vunpack.c.h.b16 %v656
    %v1024 = vunpack.c.l.b16 %v657
    %v1025 = vunpack.c.h.b16 %v657
    %v1026 = vunpack.c.l.b16 %v658
    %v1027 = vunpack.c.h.b16 %v658
    %v1028 = vunpack.c.l.b16 %v659
    %v1029 = vunpack.c.h.b16 %v659
    %v1030 = vunpack.c.l.b16 %v660
    %v1031 = vunpack.c.h.b16 %v660
    %v1032 = vunpack.c.l.b16 %v661
    %v1033 = vunpack.c.h.b16 %v661
    %v1034 = vunpack.c.l.b16 %v662
    %v1035 = vunpack.c.h.b16 %v662
    %v1036 = vunpack.c.l.b16 %v663
    %v1037 = vunpack.c.h.b16 %v663
    %v1038 = vunpack.c.l.b16 %v664
    %v1039 = vunpack.c.h.b16 %v664
    %v1040 = vunpack.c.l.b16 %v665
    %v1041 = vunpack.c.h.b16 %v665
    %v1042 = vunpack.c.l.b16 %v666
    %v1043 = vunpack.c.h.b16 %v666
    %v1044 = vunpack.c.l.b16 %v667
    %v1045 = vunpack.c.h.b16 %v667
    %v1046 = vunpack.c.l.b16 %v668
    %v1047 = vunpack.c.h.b16 %v668
    %v1048 = vunpack.c.l.b16 %v669
    %v1049 = vunpack.c.h.b16 %v669
    %v1050 = vunpack.c.l.b16 %v670
    %v1051 = vunpack.c.h.b16 %v670
    %v1052 = vunpack.c.l.b16 %v671
    %v1053 = vunpack.c.h.b16 %v671
    %v1054 = vunpack.c.l.b16 %v672
    %v1055 = vunpack.c.h.b16 %v672
    %v1056 = vunpack.c.l.b16 %v673
    %v1057 = vunpack.c.h.b16 %v673
    %v1058 = vunpack.c.l.b16 %v674
    %v1059 = vunpack.c.h.b16 %v674
    %v1060 = vunpack.c.l.b16 %v675
    %v1061 = vunpack.c.h.b16 %v675
    %v1062 = vunpack.c.l.b16 %v676
    %v1063 = vunpack.c.h.b16 %v676
    %v1064 = vunpack.c.l.b16 %v677
    %v1065 = vunpack.c.h.b16 %v677
    %v1066 = vunpack.c.l.b16 %v678
    %v1067 = vunpack.c.h.b16 %v678
    %v1068 = vunpack.c.l.b16 %v679
    %v1069 = vunpack.c.h.b16 %v679
    %v1070 = vunpack.c.l.b16 %v680
    %v1071 = vunpack.c.h.b16 %v680
    %v1072 = vunpack.c.l.b16 %v681
    %v1073 = vunpack.c.h.b16 %v681
    %v1074 = vunpack.c.l.b16 %v682
    %v1075 = vunpack.c.h.b16 %v682
    %v1076 = vunpack.c.l.b16 %v683
    %v1077 = vunpack.c.h.b16 %v683
    %v1078 = vpack.c.b16 %v826, %v822
    %v1079 = vpack.c.b16 %v827, %v823
    %v1080 = vpack.c.b16 %v828, %v824
    %v1081 = vpack.c.b16 %v829, %v825
    %v1082 = vpack.c.b16 %v834, %v830
    %v1083 = vpack.c.b16 %v835, %v831
    %v1084 = vpack.c.b16 %v836, %v832
    %v1085 = vpack.c.b16 %v837, %v833
    %v1086 = vpack.c.b16 %v842, %v838
    %v1087 = vpack.c.b16 %v843, %v839
    %v1088 = vpack.c.b16 %v844, %v840
    %v1089 = vpack.c.b16 %v845, %v841
    %v1090 = vpack.c.b16 %v850, %v846
    %v1091 = vpack.c.b16 %v851, %v847
    %v1092 = vpack.c.b16 %v852, %v848
    %v1093 = vpack.c.b16 %v853, %v849
    %v1094 = vpack.c.b16 %v858, %v854
    %v1095 = vpack.c.b16 %v859, %v855
    %v1096 = vpack.c.b16 %v860, %v856
    %v1097 = vpack.c.b16 %v861, %v857
    %v1098 = vpack.c.b16 %v866, %v862
    %v1099 = vpack.c.b16 %v867, %v863
    %v1100 = vpack.c.b16 %v868, %v864
    %v1101 = vpack.c.b16 %v869, %v865
    %v1102 = vpack.c.b16 %v874, %v870
    %v1103 = vpack.c.b16 %v875, %v871
    %v1104 = vpack.c.b16 %v876, %v872
    %v1105 = vpack.c.b16 %v877, %v873
    %v1106 = vpack.c.b16 %v882, %v878
    %v1107 = vpack.c.b16 %v883, %v879
    %v1108 = vpack.c.b16 %v884, %v880
    %v1109 = vpack.c.b16 %v885, %v881
    %v1110 = vpack.c.b16 %v890, %v886
    %v1111 = vpack.c.b16 %v891, %v887
    %v1112 = vpack.c.b16 %v892, %v888
    %v1113 = vpack.c.b16 %v893, %v889
    %v1114 = vpack.c.b16 %v898, %v894
    %v1115 = vpack.c.b16 %v899, %v895
    %v1116 = vpack.c.b16 %v900, %v896
    %v1117 = vpack.c.b16 %v901, %v897
    %v1118 = vpack.c.b16 %v906, %v902
    %v1119 = vpack.c.b16 %v907, %v903
    %v1120 = vpack.c.b16 %v908, %v904
    %v1121 = vpack.c.b16 %v909, %v905
    %v1122 = vpack.c.b16 %v914, %v910
    %v1123 = vpack.c.b16 %v915, %v911
    %v1124 = vpack.c.b16 %v916, %v912
    %v1125 = vpack.c.b16 %v917, %v913
    %v1126 = vpack.c.b16 %v922, %v918
    %v1127 = vpack.c.b16 %v923, %v919
    %v1128 = vpack.c.b16 %v924, %v920
    %v1129 = vpack.c.b16 %v925, %v921
    %v1130 = vpack.c.b16 %v930, %v926
    %v1131 = vpack.c.b16 %v931, %v927
    %v1132 = vpack.c.b16 %v932, %v928
    %v1133 = vpack.c.b16 %v933, %v929
    %v1134 = vpack.c.b16 %v938, %v934
    %v1135 = vpack.c.b16 %v939, %v935
    %v1136 = vpack.c.b16 %v940, %v936
    %v1137 = vpack.c.b16 %v941, %v937
    %v1138 = vpack.c.b16 %v946, %v942
    %v1139 = vpack.c.b16 %v947, %v943
    %v1140 = vpack.c.b16 %v948, %v944
    %v1141 = vpack.c.b16 %v949, %v945
    %v1142 = vpack.c.b16 %v954, %v950
    %v1143 = vpack.c.b16 %v955, %v951
    %v1144 = vpack.c.b16 %v956, %v952
    %v1145 = vpack.c.b16 %v957, %v953
    %v1146 = vpack.c.b16 %v962, %v958
    %v1147 = vpack.c.b16 %v963, %v959
    %v1148 = vpack.c.b16 %v964, %v960
    %v1149 = vpack.c.b16 %v965, %v961
    %v1150 = vpack.c.b16 %v970, %v966
    %v1151 = vpack.c.b16 %v971, %v967
    %v1152 = vpack.c.b16 %v972, %v968
    %v1153 = vpack.c.b16 %v973, %v969
    %v1154 = vpack.c.b16 %v978, %v974
    %v1155 = vpack.c.b16 %v979, %v975
    %v1156 = vpack.c.b16 %v980, %v976
    %v1157 = vpack.c.b16 %v981, %v977
    %v1158 = vpack.c.b16 %v986, %v982
    %v1159 = vpack.c.b16 %v987, %v983
    %v1160 = vpack.c.b16 %v988, %v984
    %v1161 = vpack.c.b16 %v989, %v985
    %v1162 = vpack.c.b16 %v994, %v990
    %v1163 = vpack.c.b16 %v995, %v991
    %v1164 = vpack.c.b16 %v996, %v992
    %v1165 = vpack.c.b16 %v997, %v993
    %v1166 = vpack.c.b16 %v1002, %v998
    %v1167 = vpack.c.b16 %v1003, %v999
    %v1168 = vpack.c.b16 %v1004, %v1000
    %v1169 = vpack.c.b16 %v1005, %v1001
    %v1170 = vpack.c.b16 %v1010, %v1006
    %v1171 = vpack.c.b16 %v1011, %v1007
    %v1172 = vpack.c.b16 %v1012, %v1008
    %v1173 = vpack.c.b16 %v1013, %v1009
    %v1174 = vpack.c.b16 %v1018, %v1014
    %v1175 = vpack.c.b16 %v1019, %v1015
    %v1176 = vpack.c.b16 %v1020, %v1016
    %v1177 = vpack.c.b16 %v1021, %v1017
    %v1178 = vpack.c.b16 %v1026, %v1022
    %v1179 = vpack.c.b16 %v1027, %v1023
    %v1180 = vpack.c.b16 %v1028, %v1024
    %v1181 = vpack.c.b16 %v1029, %v1025
    %v1182 = vpack.c.b16 %v1034, %v1030
    %v1183 = vpack.c.b16 %v1035, %v1031
    %v1184 = vpack.c.b16 %v1036, %v1032
    %v1185 = vpack.c.b16 %v1037, %v1033
    %v1186 = vpack.c.b16 %v1042, %v1038
    %v1187 = vpack.c.b16 %v1043, %v1039
    %v1188 = vpack.c.b16 %v1044, %v1040
    %v1189 = vpack.c.b16 %v1045, %v1041
    %v1190 = vpack.c.b16 %v1050, %v1046
    %v1191 = vpack.c.b16 %v1051, %v1047
    %v1192 = vpack.c.b16 %v1052, %v1048
    %v1193 = vpack.c.b16 %v1053, %v1049
    %v1194 = vpack.c.b16 %v1058, %v1054
    %v1195 = vpack.c.b16 %v1059, %v1055
    %v1196 = vpack.c.b16 %v1060, %v1056
    %v1197 = vpack.c.b16 %v1061, %v1057
    %v1198 = vpack.c.b16 %v1066, %v1062
    %v1199 = vpack.c.b16 %v1067, %v1063
    %v1200 = vpack.c.b16 %v1068, %v1064
    %v1201 = vpack.c.b16 %v1069, %v1065
    %v1202 = vpack.c.b16 %v1074, %v1070
    %v1203 = vpack.c.b16 %v1075, %v1071
    %v1204 = vpack.c.b16 %v1076, %v1072
    %v1205 = vpack.c.b16 %v1077, %v1073
    %1334 = vmatpush.bf16.msra.mxu0 %v1106
    %1335 = vmatpush.bf16.msra.mxu0 %v1102
    %1336 = vmatpush.bf16.msra.mxu0 %v1098
    %1337 = vmatpush.bf16.msra.mxu0 %v1094
    %1338 = vmatpush.bf16.msra.mxu0 %v1090
    %1339 = vmatpush.bf16.msra.mxu0 %v1086
    %1340 = vmatpush.bf16.msra.mxu0 %v1082
    %1341 = vmatpush.bf16.msra.mxu0 %v1078
    %1342 = vmatmul.bf16.gmra.mxu0 %v552
    %v1343 = vpop.f32.mrf.mxu0
    %v1344 = vadd.f32 %v686, %v1343
    %v1345 = vpop.f32.mrf.mxu0
    %1346 = vdwg.mxu0
    %1347 = vmatpush.bf16.msra.mxu0 %v1138
    %1348 = vmatpush.bf16.msra.mxu0 %v1134
    %1349 = vmatpush.bf16.msra.mxu0 %v1130
    %1350 = vmatpush.bf16.msra.mxu0 %v1126
    %1351 = vmatpush.bf16.msra.mxu0 %v1122
    %1352 = vmatpush.bf16.msra.mxu0 %v1118
    %1353 = vmatpush.bf16.msra.mxu0 %v1114
    %1354 = vmatpush.bf16.msra.mxu0 %v1110
    %1355 = vmatmul.bf16.gmra.mxu0 %v553
    %v1356 = vpop.f32.mrf.mxu0
    %v1357 = vadd.f32 %v1344, %v1356
    %v1358 = vpop.f32.mrf.mxu0
    %1359 = vdwg.mxu0
    %1360 = vmatpush.bf16.msra.mxu0 %v1170
    %1361 = vmatpush.bf16.msra.mxu0 %v1166
    %1362 = vmatpush.bf16.msra.mxu0 %v1162
    %1363 = vmatpush.bf16.msra.mxu0 %v1158
    %1364 = vmatpush.bf16.msra.mxu0 %v1154
    %1365 = vmatpush.bf16.msra.mxu0 %v1150
    %1366 = vmatpush.bf16.msra.mxu0 %v1146
    %1367 = vmatpush.bf16.msra.mxu0 %v1142
    %1368 = vmatmul.bf16.gmra.mxu0 %v554
    %v1369 = vpop.f32.mrf.mxu0
    %v1370 = vadd.f32 %v1357, %v1369
    %v1371 = vpop.f32.mrf.mxu0
    %1372 = vdwg.mxu0
    %1373 = vmatpush.bf16.msra.mxu0 %v1202
    %1374 = vmatpush.bf16.msra.mxu0 %v1198
    %1375 = vmatpush.bf16.msra.mxu0 %v1194
    %1376 = vmatpush.bf16.msra.mxu0 %v1190
    %1377 = vmatpush.bf16.msra.mxu0 %v1186
    %1378 = vmatpush.bf16.msra.mxu0 %v1182
    %1379 = vmatpush.bf16.msra.mxu0 %v1178
    %1380 = vmatpush.bf16.msra.mxu0 %v1174
    %1381 = vmatmul.bf16.gmra.mxu0 %v555
    %v1382 = vpop.f32.mrf.mxu0
    %v1383 = vadd.f32 %v1370, %v1382
    %v1384 = vpop.f32.mrf.mxu0
    %1385 = vdwg.mxu0
    %1386 = vmatpush.bf16.msra.mxu0 %v1107
    %1387 = vmatpush.bf16.msra.mxu0 %v1103
    %1388 = vmatpush.bf16.msra.mxu0 %v1099
    %1389 = vmatpush.bf16.msra.mxu0 %v1095
    %1390 = vmatpush.bf16.msra.mxu0 %v1091
    %1391 = vmatpush.bf16.msra.mxu0 %v1087
    %1392 = vmatpush.bf16.msra.mxu0 %v1083
    %1393 = vmatpush.bf16.msra.mxu0 %v1079
    %1394 = vmatmul.bf16.gmra.mxu0 %v552
    %v1395 = vpop.f32.mrf.mxu0
    %v1396 = vadd.f32 %v687, %v1395
    %v1397 = vpop.f32.mrf.mxu0
    %1398 = vdwg.mxu0
    %1399 = vmatpush.bf16.msra.mxu0 %v1139
    %1400 = vmatpush.bf16.msra.mxu0 %v1135
    %1401 = vmatpush.bf16.msra.mxu0 %v1131
    %1402 = vmatpush.bf16.msra.mxu0 %v1127
    %1403 = vmatpush.bf16.msra.mxu0 %v1123
    %1404 = vmatpush.bf16.msra.mxu0 %v1119
    %1405 = vmatpush.bf16.msra.mxu0 %v1115
    %1406 = vmatpush.bf16.msra.mxu0 %v1111
    %1407 = vmatmul.bf16.gmra.mxu0 %v553
    %v1408 = vpop.f32.mrf.mxu0
    %v1409 = vadd.f32 %v1396, %v1408
    %v1410 = vpop.f32.mrf.mxu0
    %1411 = vdwg.mxu0
    %1412 = vmatpush.bf16.msra.mxu0 %v1171
    %1413 = vmatpush.bf16.msra.mxu0 %v1167
    %1414 = vmatpush.bf16.msra.mxu0 %v1163
    %1415 = vmatpush.bf16.msra.mxu0 %v1159
    %1416 = vmatpush.bf16.msra.mxu0 %v1155
    %1417 = vmatpush.bf16.msra.mxu0 %v1151
    %1418 = vmatpush.bf16.msra.mxu0 %v1147
    %1419 = vmatpush.bf16.msra.mxu0 %v1143
    %1420 = vmatmul.bf16.gmra.mxu0 %v554
    %v1421 = vpop.f32.mrf.mxu0
    %v1422 = vadd.f32 %v1409, %v1421
    %v1423 = vpop.f32.mrf.mxu0
    %1424 = vdwg.mxu0
    %1425 = vmatpush.bf16.msra.mxu0 %v1203
    %1426 = vmatpush.bf16.msra.mxu0 %v1199
    %1427 = vmatpush.bf16.msra.mxu0 %v1195
    %1428 = vmatpush.bf16.msra.mxu0 %v1191
    %1429 = vmatpush.bf16.msra.mxu0 %v1187
    %1430 = vmatpush.bf16.msra.mxu0 %v1183
    %1431 = vmatpush.bf16.msra.mxu0 %v1179
    %1432 = vmatpush.bf16.msra.mxu0 %v1175
    %1433 = vmatmul.bf16.gmra.mxu0 %v555
    %v1434 = vpop.f32.mrf.mxu0
    %v1435 = vadd.f32 %v1422, %v1434
    %v1436 = vpop.f32.mrf.mxu0
    %1437 = vdwg.mxu0
    %1438 = vmatpush.bf16.msra.mxu0 %v1108
    %1439 = vmatpush.bf16.msra.mxu0 %v1104
    %1440 = vmatpush.bf16.msra.mxu0 %v1100
    %1441 = vmatpush.bf16.msra.mxu0 %v1096
    %1442 = vmatpush.bf16.msra.mxu0 %v1092
    %1443 = vmatpush.bf16.msra.mxu0 %v1088
    %1444 = vmatpush.bf16.msra.mxu0 %v1084
    %1445 = vmatpush.bf16.msra.mxu0 %v1080
    %1446 = vmatmul.bf16.gmra.mxu0 %v552
    %v1447 = vpop.f32.mrf.mxu0
    %v1448 = vadd.f32 %v688, %v1447
    %v1449 = vpop.f32.mrf.mxu0
    %1450 = vdwg.mxu0
    %1451 = vmatpush.bf16.msra.mxu0 %v1140
    %1452 = vmatpush.bf16.msra.mxu0 %v1136
    %1453 = vmatpush.bf16.msra.mxu0 %v1132
    %1454 = vmatpush.bf16.msra.mxu0 %v1128
    %1455 = vmatpush.bf16.msra.mxu0 %v1124
    %1456 = vmatpush.bf16.msra.mxu0 %v1120
    %1457 = vmatpush.bf16.msra.mxu0 %v1116
    %1458 = vmatpush.bf16.msra.mxu0 %v1112
    %1459 = vmatmul.bf16.gmra.mxu0 %v553
    %v1460 = vpop.f32.mrf.mxu0
    %v1461 = vadd.f32 %v1448, %v1460
    %v1462 = vpop.f32.mrf.mxu0
    %1463 = vdwg.mxu0
    %1464 = vmatpush.bf16.msra.mxu0 %v1172
    %1465 = vmatpush.bf16.msra.mxu0 %v1168
    %1466 = vmatpush.bf16.msra.mxu0 %v1164
    %1467 = vmatpush.bf16.msra.mxu0 %v1160
    %1468 = vmatpush.bf16.msra.mxu0 %v1156
    %1469 = vmatpush.bf16.msra.mxu0 %v1152
    %1470 = vmatpush.bf16.msra.mxu0 %v1148
    %1471 = vmatpush.bf16.msra.mxu0 %v1144
    %1472 = vmatmul.bf16.gmra.mxu0 %v554
    %v1473 = vpop.f32.mrf.mxu0
    %v1474 = vadd.f32 %v1461, %v1473
    %v1475 = vpop.f32.mrf.mxu0
    %1476 = vdwg.mxu0
    %1477 = vmatpush.bf16.msra.mxu0 %v1204
    %1478 = vmatpush.bf16.msra.mxu0 %v1200
    %1479 = vmatpush.bf16.msra.mxu0 %v1196
    %1480 = vmatpush.bf16.msra.mxu0 %v1192
    %1481 = vmatpush.bf16.msra.mxu0 %v1188
    %1482 = vmatpush.bf16.msra.mxu0 %v1184
    %1483 = vmatpush.bf16.msra.mxu0 %v1180
    %1484 = vmatpush.bf16.msra.mxu0 %v1176
    %1485 = vmatmul.bf16.gmra.mxu0 %v555
    %v1486 = vpop.f32.mrf.mxu0
    %v1487 = vadd.f32 %v1474, %v1486
    %v1488 = vpop.f32.mrf.mxu0
    %1489 = vdwg.mxu0
    %1490 = vmatpush.bf16.msra.mxu0 %v1109
    %1491 = vmatpush.bf16.msra.mxu0 %v1105
    %1492 = vmatpush.bf16.msra.mxu0 %v1101
    %1493 = vmatpush.bf16.msra.mxu0 %v1097
    %1494 = vmatpush.bf16.msra.mxu0 %v1093
    %1495 = vmatpush.bf16.msra.mxu0 %v1089
    %1496 = vmatpush.bf16.msra.mxu0 %v1085
    %1497 = vmatpush.bf16.msra.mxu0 %v1081
    %1498 = vmatmul.bf16.gmra.mxu0 %v552
    %v1499 = vpop.f32.mrf.mxu0
    %v1500 = vadd.f32 %v689, %v1499
    %v1501 = vpop.f32.mrf.mxu0
    %1502 = vdwg.mxu0
    %1503 = vmatpush.bf16.msra.mxu0 %v1141
    %1504 = vmatpush.bf16.msra.mxu0 %v1137
    %1505 = vmatpush.bf16.msra.mxu0 %v1133
    %1506 = vmatpush.bf16.msra.mxu0 %v1129
    %1507 = vmatpush.bf16.msra.mxu0 %v1125
    %1508 = vmatpush.bf16.msra.mxu0 %v1121
    %1509 = vmatpush.bf16.msra.mxu0 %v1117
    %1510 = vmatpush.bf16.msra.mxu0 %v1113
    %1511 = vmatmul.bf16.gmra.mxu0 %v553
    %v1512 = vpop.f32.mrf.mxu0
    %v1513 = vadd.f32 %v1500, %v1512
    %v1514 = vpop.f32.mrf.mxu0
    %1515 = vdwg.mxu0
    %1516 = vmatpush.bf16.msra.mxu0 %v1173
    %1517 = vmatpush.bf16.msra.mxu0 %v1169
    %1518 = vmatpush.bf16.msra.mxu0 %v1165
    %1519 = vmatpush.bf16.msra.mxu0 %v1161
    %1520 = vmatpush.bf16.msra.mxu0 %v1157
    %1521 = vmatpush.bf16.msra.mxu0 %v1153
    %1522 = vmatpush.bf16.msra.mxu0 %v1149
    %1523 = vmatpush.bf16.msra.mxu0 %v1145
    %1524 = vmatmul.bf16.gmra.mxu0 %v554
    %v1525 = vpop.f32.mrf.mxu0
    %v1526 = vadd.f32 %v1513, %v1525
    %v1527 = vpop.f32.mrf.mxu0
    %1528 = vdwg.mxu0
    %1529 = vmatpush.bf16.msra.mxu0 %v1205
    %1530 = vmatpush.bf16.msra.mxu0 %v1201
    %1531 = vmatpush.bf16.msra.mxu0 %v1197
    %1532 = vmatpush.bf16.msra.mxu0 %v1193
    %1533 = vmatpush.bf16.msra.mxu0 %v1189
    %1534 = vmatpush.bf16.msra.mxu0 %v1185
    %1535 = vmatpush.bf16.msra.mxu0 %v1181
    %1536 = vmatpush.bf16.msra.mxu0 %v1177
    %1537 = vmatmul.bf16.gmra.mxu0 %v555
    %v1538 = vpop.f32.mrf.mxu0
    %v1539 = vadd.f32 %v1526, %v1538
    %v1540 = vpop.f32.mrf.mxu0
    %1541 = vdwg.mxu0
    %v1542 = vpack.c.bf16 %v1435, %v1383
    %v1543 = vpack.c.bf16 %v1539, %v1487
    %v1544 = vxor.u32 %v1542, 2147516416
    %v1545 = vxor.u32 %v1543, 2147516416
    %v1546 = vunpack.c.l.bf16 %v1544
    %v1547 = vunpack.c.h.bf16 %v1544
    %v1548 = vunpack.c.l.bf16 %v1545
    %v1549 = vunpack.c.h.bf16 %v1545
    %v1550 = vmul.f32 %v1546, 1.442695
    %v1551 = vpow.pop %v1550
    %v1552 = vmul.f32 %v1547, 1.442695
    %v1553 = vpow.pop %v1552
    %v1554 = vmul.f32 %v1548, 1.442695
    %v1555 = vpow.pop %v1554
    %v1556 = vmul.f32 %v1549, 1.442695
    %v1557 = vpow.pop %v1556
    %v1558 = vpack.c.bf16 %v1553, %v1551
    %v1559 = vpack.c.bf16 %v1557, %v1555
    %v1560 = vunpack.c.l.bf16 %v1558
    %v1561 = vunpack.c.h.bf16 %v1558
    %v1562 = vunpack.c.l.bf16 %v1559
    %v1563 = vunpack.c.h.bf16 %v1559
    %v1564 = vadd.f32 %v1560, 1.0
    %v1565 = vadd.f32 %v1561, 1.0
    %v1566 = vadd.f32 %v1562, 1.0
    %v1567 = vadd.f32 %v1563, 1.0
    %v1568 = vpack.c.bf16 %v1565, %v1564
    %v1569 = vpack.c.bf16 %v1567, %v1566
    %v1570 = vunpack.c.h.bf16 %v1568
    %v1571 = vunpack.c.l.bf16 %v1568
    %v1572 = vrcp.pop %v1570
    %v1573 = vmul.f32 %v122, %v1572
    %v1574 = vrcp.pop %v1571
    %v1575 = vmul.f32 %v123, %v1574
    %v1576 = vpack.c.bf16 %v1573, %v1575
    %v1577 = vunpack.c.h.bf16 %v1569
    %v1578 = vunpack.c.l.bf16 %v1569
    %v1579 = vrcp.pop %v1577
    %v1580 = vmul.f32 %v122, %v1579
    %v1581 = vrcp.pop %v1578
    %v1582 = vmul.f32 %v123, %v1581
    %v1583 = vpack.c.bf16 %v1580, %v1582
    %v1584 = vunpack.c.l.bf16 %v1542
    %v1585 = vunpack.c.h.bf16 %v1542
    %v1586 = vunpack.c.l.bf16 %v1543
    %v1587 = vunpack.c.h.bf16 %v1543
    %v1588 = vunpack.c.l.bf16 %v1576
    %v1589 = vunpack.c.h.bf16 %v1576
    %v1590 = vunpack.c.l.bf16 %v1583
    %v1591 = vunpack.c.h.bf16 %v1583
    %v1592 = vmul.f32 %v1584, %v1588
    %v1593 = vmul.f32 %v1585, %v1589
    %v1594 = vmul.f32 %v1586, %v1590
    %v1595 = vmul.f32 %v1587, %v1591
    %v1596 = vpack.c.bf16 %v1592, %v1592
    %v1597 = vpack.c.bf16 %v1593, %v1593
    %v1598 = vpack.c.bf16 %v1594, %v1594
    %v1599 = vpack.c.bf16 %v1595, %v1595
    %v1600 = vld [vmem:[#allocation5] sm:$0xff]
    %v1601 = vld [vmem:[#allocation5 + $0x8] sm:$0xff]
    %v1602 = vld [vmem:[#allocation5 + $0x10] sm:$0xff]
    %v1603 = vld [vmem:[#allocation5 + $0x18] sm:$0xff]
    %v1604 = vld [vmem:[#allocation5 + $0x20] sm:$0xff]
    %v1605 = vld [vmem:[#allocation5 + $0x28] sm:$0xff]
    %v1606 = vld [vmem:[#allocation5 + $0x30] sm:$0xff]
    %v1607 = vld [vmem:[#allocation5 + $0x38] sm:$0xff]
    %v1608 = vld [vmem:[#allocation5 + $0x40] sm:$0xff]
    %v1609 = vld [vmem:[#allocation5 + $0x48] sm:$0xff]
    %v1610 = vld [vmem:[#allocation5 + $0x50] sm:$0xff]
    %v1611 = vld [vmem:[#allocation5 + $0x58] sm:$0xff]
    %v1612 = vld [vmem:[#allocation5 + $0x60] sm:$0xff]
    %v1613 = vld [vmem:[#allocation5 + $0x68] sm:$0xff]
    %v1614 = vld [vmem:[#allocation5 + $0x70] sm:$0xff]
    %v1615 = vld [vmem:[#allocation5 + $0x78] sm:$0xff]
    %v1616 = vld [vmem:[#allocation5 + $0x80] sm:$0xff]
    %v1617 = vld [vmem:[#allocation5 + $0x88] sm:$0xff]
    %v1618 = vld [vmem:[#allocation5 + $0x90] sm:$0xff]
    %v1619 = vld [vmem:[#allocation5 + $0x98] sm:$0xff]
    %v1620 = vld [vmem:[#allocation5 + $0xa0] sm:$0xff]
    %v1621 = vld [vmem:[#allocation5 + $0xa8] sm:$0xff]
    %v1622 = vld [vmem:[#allocation5 + $0xb0] sm:$0xff]
    %v1623 = vld [vmem:[#allocation5 + $0xb8] sm:$0xff]
    %v1624 = vld [vmem:[#allocation5 + $0xc0] sm:$0xff]
    %v1625 = vld [vmem:[#allocation5 + $0xc8] sm:$0xff]
    %v1626 = vld [vmem:[#allocation5 + $0xd0] sm:$0xff]
    %v1627 = vld [vmem:[#allocation5 + $0xd8] sm:$0xff]
    %v1628 = vld [vmem:[#allocation5 + $0xe0] sm:$0xff]
    %v1629 = vld [vmem:[#allocation5 + $0xe8] sm:$0xff]
    %v1630 = vld [vmem:[#allocation5 + $0xf0] sm:$0xff]
    %v1631 = vld [vmem:[#allocation5 + $0xf8] sm:$0xff]
    %v1632 = vld [vmem:[#allocation5 + $0x100] sm:$0xff]
    %v1633 = vld [vmem:[#allocation5 + $0x108] sm:$0xff]
    %v1634 = vld [vmem:[#allocation5 + $0x110] sm:$0xff]
    %v1635 = vld [vmem:[#allocation5 + $0x118] sm:$0xff]
    %v1636 = vld [vmem:[#allocation5 + $0x120] sm:$0xff]
    %v1637 = vld [vmem:[#allocation5 + $0x128] sm:$0xff]
    %v1638 = vld [vmem:[#allocation5 + $0x130] sm:$0xff]
    %v1639 = vld [vmem:[#allocation5 + $0x138] sm:$0xff]
    %v1640 = vld [vmem:[#allocation5 + $0x140] sm:$0xff]
    %v1641 = vld [vmem:[#allocation5 + $0x148] sm:$0xff]
    %v1642 = vld [vmem:[#allocation5 + $0x150] sm:$0xff]
    %v1643 = vld [vmem:[#allocation5 + $0x158] sm:$0xff]
    %v1644 = vld [vmem:[#allocation5 + $0x160] sm:$0xff]
    %v1645 = vld [vmem:[#allocation5 + $0x168] sm:$0xff]
    %v1646 = vld [vmem:[#allocation5 + $0x170] sm:$0xff]
    %v1647 = vld [vmem:[#allocation5 + $0x178] sm:$0xff]
    %v1648 = vld [vmem:[#allocation5 + $0x180] sm:$0xff]
    %v1649 = vld [vmem:[#allocation5 + $0x188] sm:$0xff]
    %v1650 = vld [vmem:[#allocation5 + $0x190] sm:$0xff]
    %v1651 = vld [vmem:[#allocation5 + $0x198] sm:$0xff]
    %v1652 = vld [vmem:[#allocation5 + $0x1a0] sm:$0xff]
    %v1653 = vld [vmem:[#allocation5 + $0x1a8] sm:$0xff]
    %v1654 = vld [vmem:[#allocation5 + $0x1b0] sm:$0xff]
    %v1655 = vld [vmem:[#allocation5 + $0x1b8] sm:$0xff]
    %v1656 = vld [vmem:[#allocation5 + $0x1c0] sm:$0xff]
    %v1657 = vld [vmem:[#allocation5 + $0x1c8] sm:$0xff]
    %v1658 = vld [vmem:[#allocation5 + $0x1d0] sm:$0xff]
    %v1659 = vld [vmem:[#allocation5 + $0x1d8] sm:$0xff]
    %v1660 = vld [vmem:[#allocation5 + $0x1e0] sm:$0xff]
    %v1661 = vld [vmem:[#allocation5 + $0x1e8] sm:$0xff]
    %v1662 = vld [vmem:[#allocation5 + $0x1f0] sm:$0xff]
    %v1663 = vld [vmem:[#allocation5 + $0x1f8] sm:$0xff]
    %v1664 = vld [vmem:[#allocation5 + $0x200] sm:$0xff]
    %v1665 = vld [vmem:[#allocation5 + $0x208] sm:$0xff]
    %v1666 = vld [vmem:[#allocation5 + $0x210] sm:$0xff]
    %v1667 = vld [vmem:[#allocation5 + $0x218] sm:$0xff]
    %v1668 = vld [vmem:[#allocation5 + $0x220] sm:$0xff]
    %v1669 = vld [vmem:[#allocation5 + $0x228] sm:$0xff]
    %v1670 = vld [vmem:[#allocation5 + $0x230] sm:$0xff]
    %v1671 = vld [vmem:[#allocation5 + $0x238] sm:$0xff]
    %v1672 = vld [vmem:[#allocation5 + $0x240] sm:$0xff]
    %v1673 = vld [vmem:[#allocation5 + $0x248] sm:$0xff]
    %v1674 = vld [vmem:[#allocation5 + $0x250] sm:$0xff]
    %v1675 = vld [vmem:[#allocation5 + $0x258] sm:$0xff]
    %v1676 = vld [vmem:[#allocation5 + $0x260] sm:$0xff]
    %v1677 = vld [vmem:[#allocation5 + $0x268] sm:$0xff]
    %v1678 = vld [vmem:[#allocation5 + $0x270] sm:$0xff]
    %v1679 = vld [vmem:[#allocation5 + $0x278] sm:$0xff]
    %v1680 = vld [vmem:[#allocation5 + $0x280] sm:$0xff]
    %v1681 = vld [vmem:[#allocation5 + $0x288] sm:$0xff]
    %v1682 = vld [vmem:[#allocation5 + $0x290] sm:$0xff]
    %v1683 = vld [vmem:[#allocation5 + $0x298] sm:$0xff]
    %v1684 = vld [vmem:[#allocation5 + $0x2a0] sm:$0xff]
    %v1685 = vld [vmem:[#allocation5 + $0x2a8] sm:$0xff]
    %v1686 = vld [vmem:[#allocation5 + $0x2b0] sm:$0xff]
    %v1687 = vld [vmem:[#allocation5 + $0x2b8] sm:$0xff]
    %v1688 = vld [vmem:[#allocation5 + $0x2c0] sm:$0xff]
    %v1689 = vld [vmem:[#allocation5 + $0x2c8] sm:$0xff]
    %v1690 = vld [vmem:[#allocation5 + $0x2d0] sm:$0xff]
    %v1691 = vld [vmem:[#allocation5 + $0x2d8] sm:$0xff]
    %v1692 = vld [vmem:[#allocation5 + $0x2e0] sm:$0xff]
    %v1693 = vld [vmem:[#allocation5 + $0x2e8] sm:$0xff]
    %v1694 = vld [vmem:[#allocation5 + $0x2f0] sm:$0xff]
    %v1695 = vld [vmem:[#allocation5 + $0x2f8] sm:$0xff]
    %v1696 = vld [vmem:[#allocation5 + $0x300] sm:$0xff]
    %v1697 = vld [vmem:[#allocation5 + $0x308] sm:$0xff]
    %v1698 = vld [vmem:[#allocation5 + $0x310] sm:$0xff]
    %v1699 = vld [vmem:[#allocation5 + $0x318] sm:$0xff]
    %v1700 = vld [vmem:[#allocation5 + $0x320] sm:$0xff]
    %v1701 = vld [vmem:[#allocation5 + $0x328] sm:$0xff]
    %v1702 = vld [vmem:[#allocation5 + $0x330] sm:$0xff]
    %v1703 = vld [vmem:[#allocation5 + $0x338] sm:$0xff]
    %v1704 = vld [vmem:[#allocation5 + $0x340] sm:$0xff]
    %v1705 = vld [vmem:[#allocation5 + $0x348] sm:$0xff]
    %v1706 = vld [vmem:[#allocation5 + $0x350] sm:$0xff]
    %v1707 = vld [vmem:[#allocation5 + $0x358] sm:$0xff]
    %v1708 = vld [vmem:[#allocation5 + $0x360] sm:$0xff]
    %v1709 = vld [vmem:[#allocation5 + $0x368] sm:$0xff]
    %v1710 = vld [vmem:[#allocation5 + $0x370] sm:$0xff]
    %v1711 = vld [vmem:[#allocation5 + $0x378] sm:$0xff]
    %v1712 = vld [vmem:[#allocation5 + $0x380] sm:$0xff]
    %v1713 = vld [vmem:[#allocation5 + $0x388] sm:$0xff]
    %v1714 = vld [vmem:[#allocation5 + $0x390] sm:$0xff]
    %v1715 = vld [vmem:[#allocation5 + $0x398] sm:$0xff]
    %v1716 = vld [vmem:[#allocation5 + $0x3a0] sm:$0xff]
    %v1717 = vld [vmem:[#allocation5 + $0x3a8] sm:$0xff]
    %v1718 = vld [vmem:[#allocation5 + $0x3b0] sm:$0xff]
    %v1719 = vld [vmem:[#allocation5 + $0x3b8] sm:$0xff]
    %v1720 = vld [vmem:[#allocation5 + $0x3c0] sm:$0xff]
    %v1721 = vld [vmem:[#allocation5 + $0x3c8] sm:$0xff]
    %v1722 = vld [vmem:[#allocation5 + $0x3d0] sm:$0xff]
    %v1723 = vld [vmem:[#allocation5 + $0x3d8] sm:$0xff]
    %v1724 = vld [vmem:[#allocation5 + $0x3e0] sm:$0xff]
    %v1725 = vld [vmem:[#allocation5 + $0x3e8] sm:$0xff]
    %v1726 = vld [vmem:[#allocation5 + $0x3f0] sm:$0xff]
    %v1727 = vld [vmem:[#allocation5 + $0x3f8] sm:$0xff]
    %v1728 = vld [vmem:[%s16] sm:$0xf]
    %v1730 = vperm.slane %v1728, 0
    %v1731 = vperm.slane %v1728, 1
    %v1732 = vperm.slane %v1728, 2
    %v1733 = vperm.slane %v1728, 3
    %v1866 = vunpack.c.l.b16 %v1600
    %v1867 = vunpack.c.h.b16 %v1600
    %v1868 = vunpack.c.l.b16 %v1601
    %v1869 = vunpack.c.h.b16 %v1601
    %v1870 = vunpack.c.l.b16 %v1602
    %v1871 = vunpack.c.h.b16 %v1602
    %v1872 = vunpack.c.l.b16 %v1603
    %v1873 = vunpack.c.h.b16 %v1603
    %v1874 = vunpack.c.l.b16 %v1604
    %v1875 = vunpack.c.h.b16 %v1604
    %v1876 = vunpack.c.l.b16 %v1605
    %v1877 = vunpack.c.h.b16 %v1605
    %v1878 = vunpack.c.l.b16 %v1606
    %v1879 = vunpack.c.h.b16 %v1606
    %v1880 = vunpack.c.l.b16 %v1607
    %v1881 = vunpack.c.h.b16 %v1607
    %v1882 = vunpack.c.l.b16 %v1608
    %v1883 = vunpack.c.h.b16 %v1608
    %v1884 = vunpack.c.l.b16 %v1609
    %v1885 = vunpack.c.h.b16 %v1609
    %v1886 = vunpack.c.l.b16 %v1610
    %v1887 = vunpack.c.h.b16 %v1610
    %v1888 = vunpack.c.l.b16 %v1611
    %v1889 = vunpack.c.h.b16 %v1611
    %v1890 = vunpack.c.l.b16 %v1612
    %v1891 = vunpack.c.h.b16 %v1612
    %v1892 = vunpack.c.l.b16 %v1613
    %v1893 = vunpack.c.h.b16 %v1613
    %v1894 = vunpack.c.l.b16 %v1614
    %v1895 = vunpack.c.h.b16 %v1614
    %v1896 = vunpack.c.l.b16 %v1615
    %v1897 = vunpack.c.h.b16 %v1615
    %v1898 = vunpack.c.l.b16 %v1616
    %v1899 = vunpack.c.h.b16 %v1616
    %v1900 = vunpack.c.l.b16 %v1617
    %v1901 = vunpack.c.h.b16 %v1617
    %v1902 = vunpack.c.l.b16 %v1618
    %v1903 = vunpack.c.h.b16 %v1618
    %v1904 = vunpack.c.l.b16 %v1619
    %v1905 = vunpack.c.h.b16 %v1619
    %v1906 = vunpack.c.l.b16 %v1620
    %v1907 = vunpack.c.h.b16 %v1620
    %v1908 = vunpack.c.l.b16 %v1621
    %v1909 = vunpack.c.h.b16 %v1621
    %v1910 = vunpack.c.l.b16 %v1622
    %v1911 = vunpack.c.h.b16 %v1622
    %v1912 = vunpack.c.l.b16 %v1623
    %v1913 = vunpack.c.h.b16 %v1623
    %v1914 = vunpack.c.l.b16 %v1624
    %v1915 = vunpack.c.h.b16 %v1624
    %v1916 = vunpack.c.l.b16 %v1625
    %v1917 = vunpack.c.h.b16 %v1625
    %v1918 = vunpack.c.l.b16 %v1626
    %v1919 = vunpack.c.h.b16 %v1626
    %v1920 = vunpack.c.l.b16 %v1627
    %v1921 = vunpack.c.h.b16 %v1627
    %v1922 = vunpack.c.l.b16 %v1628
    %v1923 = vunpack.c.h.b16 %v1628
    %v1924 = vunpack.c.l.b16 %v1629
    %v1925 = vunpack.c.h.b16 %v1629
    %v1926 = vunpack.c.l.b16 %v1630
    %v1927 = vunpack.c.h.b16 %v1630
    %v1928 = vunpack.c.l.b16 %v1631
    %v1929 = vunpack.c.h.b16 %v1631
    %v1930 = vunpack.c.l.b16 %v1632
    %v1931 = vunpack.c.h.b16 %v1632
    %v1932 = vunpack.c.l.b16 %v1633
    %v1933 = vunpack.c.h.b16 %v1633
    %v1934 = vunpack.c.l.b16 %v1634
    %v1935 = vunpack.c.h.b16 %v1634
    %v1936 = vunpack.c.l.b16 %v1635
    %v1937 = vunpack.c.h.b16 %v1635
    %v1938 = vunpack.c.l.b16 %v1636
    %v1939 = vunpack.c.h.b16 %v1636
    %v1940 = vunpack.c.l.b16 %v1637
    %v1941 = vunpack.c.h.b16 %v1637
    %v1942 = vunpack.c.l.b16 %v1638
    %v1943 = vunpack.c.h.b16 %v1638
    %v1944 = vunpack.c.l.b16 %v1639
    %v1945 = vunpack.c.h.b16 %v1639
    %v1946 = vunpack.c.l.b16 %v1640
    %v1947 = vunpack.c.h.b16 %v1640
    %v1948 = vunpack.c.l.b16 %v1641
    %v1949 = vunpack.c.h.b16 %v1641
    %v1950 = vunpack.c.l.b16 %v1642
    %v1951 = vunpack.c.h.b16 %v1642
    %v1952 = vunpack.c.l.b16 %v1643
    %v1953 = vunpack.c.h.b16 %v1643
    %v1954 = vunpack.c.l.b16 %v1644
    %v1955 = vunpack.c.h.b16 %v1644
    %v1956 = vunpack.c.l.b16 %v1645
    %v1957 = vunpack.c.h.b16 %v1645
    %v1958 = vunpack.c.l.b16 %v1646
    %v1959 = vunpack.c.h.b16 %v1646
    %v1960 = vunpack.c.l.b16 %v1647
    %v1961 = vunpack.c.h.b16 %v1647
    %v1962 = vunpack.c.l.b16 %v1648
    %v1963 = vunpack.c.h.b16 %v1648
    %v1964 = vunpack.c.l.b16 %v1649
    %v1965 = vunpack.c.h.b16 %v1649
    %v1966 = vunpack.c.l.b16 %v1650
    %v1967 = vunpack.c.h.b16 %v1650
    %v1968 = vunpack.c.l.b16 %v1651
    %v1969 = vunpack.c.h.b16 %v1651
    %v1970 = vunpack.c.l.b16 %v1652
    %v1971 = vunpack.c.h.b16 %v1652
    %v1972 = vunpack.c.l.b16 %v1653
    %v1973 = vunpack.c.h.b16 %v1653
    %v1974 = vunpack.c.l.b16 %v1654
    %v1975 = vunpack.c.h.b16 %v1654
    %v1976 = vunpack.c.l.b16 %v1655
    %v1977 = vunpack.c.h.b16 %v1655
    %v1978 = vunpack.c.l.b16 %v1656
    %v1979 = vunpack.c.h.b16 %v1656
    %v1980 = vunpack.c.l.b16 %v1657
    %v1981 = vunpack.c.h.b16 %v1657
    %v1982 = vunpack.c.l.b16 %v1658
    %v1983 = vunpack.c.h.b16 %v1658
    %v1984 = vunpack.c.l.b16 %v1659
    %v1985 = vunpack.c.h.b16 %v1659
    %v1986 = vunpack.c.l.b16 %v1660
    %v1987 = vunpack.c.h.b16 %v1660
    %v1988 = vunpack.c.l.b16 %v1661
    %v1989 = vunpack.c.h.b16 %v1661
    %v1990 = vunpack.c.l.b16 %v1662
    %v1991 = vunpack.c.h.b16 %v1662
    %v1992 = vunpack.c.l.b16 %v1663
    %v1993 = vunpack.c.h.b16 %v1663
    %v1994 = vunpack.c.l.b16 %v1664
    %v1995 = vunpack.c.h.b16 %v1664
    %v1996 = vunpack.c.l.b16 %v1665
    %v1997 = vunpack.c.h.b16 %v1665
    %v1998 = vunpack.c.l.b16 %v1666
    %v1999 = vunpack.c.h.b16 %v1666
    %v2000 = vunpack.c.l.b16 %v1667
    %v2001 = vunpack.c.h.b16 %v1667
    %v2002 = vunpack.c.l.b16 %v1668
    %v2003 = vunpack.c.h.b16 %v1668
    %v2004 = vunpack.c.l.b16 %v1669
    %v2005 = vunpack.c.h.b16 %v1669
    %v2006 = vunpack.c.l.b16 %v1670
    %v2007 = vunpack.c.h.b16 %v1670
    %v2008 = vunpack.c.l.b16 %v1671
    %v2009 = vunpack.c.h.b16 %v1671
    %v2010 = vunpack.c.l.b16 %v1672
    %v2011 = vunpack.c.h.b16 %v1672
    %v2012 = vunpack.c.l.b16 %v1673
    %v2013 = vunpack.c.h.b16 %v1673
    %v2014 = vunpack.c.l.b16 %v1674
    %v2015 = vunpack.c.h.b16 %v1674
    %v2016 = vunpack.c.l.b16 %v1675
    %v2017 = vunpack.c.h.b16 %v1675
    %v2018 = vunpack.c.l.b16 %v1676
    %v2019 = vunpack.c.h.b16 %v1676
    %v2020 = vunpack.c.l.b16 %v1677
    %v2021 = vunpack.c.h.b16 %v1677
    %v2022 = vunpack.c.l.b16 %v1678
    %v2023 = vunpack.c.h.b16 %v1678
    %v2024 = vunpack.c.l.b16 %v1679
    %v2025 = vunpack.c.h.b16 %v1679
    %v2026 = vunpack.c.l.b16 %v1680
    %v2027 = vunpack.c.h.b16 %v1680
    %v2028 = vunpack.c.l.b16 %v1681
    %v2029 = vunpack.c.h.b16 %v1681
    %v2030 = vunpack.c.l.b16 %v1682
    %v2031 = vunpack.c.h.b16 %v1682
    %v2032 = vunpack.c.l.b16 %v1683
    %v2033 = vunpack.c.h.b16 %v1683
    %v2034 = vunpack.c.l.b16 %v1684
    %v2035 = vunpack.c.h.b16 %v1684
    %v2036 = vunpack.c.l.b16 %v1685
    %v2037 = vunpack.c.h.b16 %v1685
    %v2038 = vunpack.c.l.b16 %v1686
    %v2039 = vunpack.c.h.b16 %v1686
    %v2040 = vunpack.c.l.b16 %v1687
    %v2041 = vunpack.c.h.b16 %v1687
    %v2042 = vunpack.c.l.b16 %v1688
    %v2043 = vunpack.c.h.b16 %v1688
    %v2044 = vunpack.c.l.b16 %v1689
    %v2045 = vunpack.c.h.b16 %v1689
    %v2046 = vunpack.c.l.b16 %v1690
    %v2047 = vunpack.c.h.b16 %v1690
    %v2048 = vunpack.c.l.b16 %v1691
    %v2049 = vunpack.c.h.b16 %v1691
    %v2050 = vunpack.c.l.b16 %v1692
    %v2051 = vunpack.c.h.b16 %v1692
    %v2052 = vunpack.c.l.b16 %v1693
    %v2053 = vunpack.c.h.b16 %v1693
    %v2054 = vunpack.c.l.b16 %v1694
    %v2055 = vunpack.c.h.b16 %v1694
    %v2056 = vunpack.c.l.b16 %v1695
    %v2057 = vunpack.c.h.b16 %v1695
    %v2058 = vunpack.c.l.b16 %v1696
    %v2059 = vunpack.c.h.b16 %v1696
    %v2060 = vunpack.c.l.b16 %v1697
    %v2061 = vunpack.c.h.b16 %v1697
    %v2062 = vunpack.c.l.b16 %v1698
    %v2063 = vunpack.c.h.b16 %v1698
    %v2064 = vunpack.c.l.b16 %v1699
    %v2065 = vunpack.c.h.b16 %v1699
    %v2066 = vunpack.c.l.b16 %v1700
    %v2067 = vunpack.c.h.b16 %v1700
    %v2068 = vunpack.c.l.b16 %v1701
    %v2069 = vunpack.c.h.b16 %v1701
    %v2070 = vunpack.c.l.b16 %v1702
    %v2071 = vunpack.c.h.b16 %v1702
    %v2072 = vunpack.c.l.b16 %v1703
    %v2073 = vunpack.c.h.b16 %v1703
    %v2074 = vunpack.c.l.b16 %v1704
    %v2075 = vunpack.c.h.b16 %v1704
    %v2076 = vunpack.c.l.b16 %v1705
    %v2077 = vunpack.c.h.b16 %v1705
    %v2078 = vunpack.c.l.b16 %v1706
    %v2079 = vunpack.c.h.b16 %v1706
    %v2080 = vunpack.c.l.b16 %v1707
    %v2081 = vunpack.c.h.b16 %v1707
    %v2082 = vunpack.c.l.b16 %v1708
    %v2083 = vunpack.c.h.b16 %v1708
    %v2084 = vunpack.c.l.b16 %v1709
    %v2085 = vunpack.c.h.b16 %v1709
    %v2086 = vunpack.c.l.b16 %v1710
    %v2087 = vunpack.c.h.b16 %v1710
    %v2088 = vunpack.c.l.b16 %v1711
    %v2089 = vunpack.c.h.b16 %v1711
    %v2090 = vunpack.c.l.b16 %v1712
    %v2091 = vunpack.c.h.b16 %v1712
    %v2092 = vunpack.c.l.b16 %v1713
    %v2093 = vunpack.c.h.b16 %v1713
    %v2094 = vunpack.c.l.b16 %v1714
    %v2095 = vunpack.c.h.b16 %v1714
    %v2096 = vunpack.c.l.b16 %v1715
    %v2097 = vunpack.c.h.b16 %v1715
    %v2098 = vunpack.c.l.b16 %v1716
    %v2099 = vunpack.c.h.b16 %v1716
    %v2100 = vunpack.c.l.b16 %v1717
    %v2101 = vunpack.c.h.b16 %v1717
    %v2102 = vunpack.c.l.b16 %v1718
    %v2103 = vunpack.c.h.b16 %v1718
    %v2104 = vunpack.c.l.b16 %v1719
    %v2105 = vunpack.c.h.b16 %v1719
    %v2106 = vunpack.c.l.b16 %v1720
    %v2107 = vunpack.c.h.b16 %v1720
    %v2108 = vunpack.c.l.b16 %v1721
    %v2109 = vunpack.c.h.b16 %v1721
    %v2110 = vunpack.c.l.b16 %v1722
    %v2111 = vunpack.c.h.b16 %v1722
    %v2112 = vunpack.c.l.b16 %v1723
    %v2113 = vunpack.c.h.b16 %v1723
    %v2114 = vunpack.c.l.b16 %v1724
    %v2115 = vunpack.c.h.b16 %v1724
    %v2116 = vunpack.c.l.b16 %v1725
    %v2117 = vunpack.c.h.b16 %v1725
    %v2118 = vunpack.c.l.b16 %v1726
    %v2119 = vunpack.c.h.b16 %v1726
    %v2120 = vunpack.c.l.b16 %v1727
    %v2121 = vunpack.c.h.b16 %v1727
    %v2122 = vpack.c.b16 %v1870, %v1866
    %v2123 = vpack.c.b16 %v1871, %v1867
    %v2124 = vpack.c.b16 %v1872, %v1868
    %v2125 = vpack.c.b16 %v1873, %v1869
    %v2126 = vpack.c.b16 %v1878, %v1874
    %v2127 = vpack.c.b16 %v1879, %v1875
    %v2128 = vpack.c.b16 %v1880, %v1876
    %v2129 = vpack.c.b16 %v1881, %v1877
    %v2130 = vpack.c.b16 %v1886, %v1882
    %v2131 = vpack.c.b16 %v1887, %v1883
    %v2132 = vpack.c.b16 %v1888, %v1884
    %v2133 = vpack.c.b16 %v1889, %v1885
    %v2134 = vpack.c.b16 %v1894, %v1890
    %v2135 = vpack.c.b16 %v1895, %v1891
    %v2136 = vpack.c.b16 %v1896, %v1892
    %v2137 = vpack.c.b16 %v1897, %v1893
    %v2138 = vpack.c.b16 %v1902, %v1898
    %v2139 = vpack.c.b16 %v1903, %v1899
    %v2140 = vpack.c.b16 %v1904, %v1900
    %v2141 = vpack.c.b16 %v1905, %v1901
    %v2142 = vpack.c.b16 %v1910, %v1906
    %v2143 = vpack.c.b16 %v1911, %v1907
    %v2144 = vpack.c.b16 %v1912, %v1908
    %v2145 = vpack.c.b16 %v1913, %v1909
    %v2146 = vpack.c.b16 %v1918, %v1914
    %v2147 = vpack.c.b16 %v1919, %v1915
    %v2148 = vpack.c.b16 %v1920, %v1916
    %v2149 = vpack.c.b16 %v1921, %v1917
    %v2150 = vpack.c.b16 %v1926, %v1922
    %v2151 = vpack.c.b16 %v1927, %v1923
    %v2152 = vpack.c.b16 %v1928, %v1924
    %v2153 = vpack.c.b16 %v1929, %v1925
    %v2154 = vpack.c.b16 %v1934, %v1930
    %v2155 = vpack.c.b16 %v1935, %v1931
    %v2156 = vpack.c.b16 %v1936, %v1932
    %v2157 = vpack.c.b16 %v1937, %v1933
    %v2158 = vpack.c.b16 %v1942, %v1938
    %v2159 = vpack.c.b16 %v1943, %v1939
    %v2160 = vpack.c.b16 %v1944, %v1940
    %v2161 = vpack.c.b16 %v1945, %v1941
    %v2162 = vpack.c.b16 %v1950, %v1946
    %v2163 = vpack.c.b16 %v1951, %v1947
    %v2164 = vpack.c.b16 %v1952, %v1948
    %v2165 = vpack.c.b16 %v1953, %v1949
    %v2166 = vpack.c.b16 %v1958, %v1954
    %v2167 = vpack.c.b16 %v1959, %v1955
    %v2168 = vpack.c.b16 %v1960, %v1956
    %v2169 = vpack.c.b16 %v1961, %v1957
    %v2170 = vpack.c.b16 %v1966, %v1962
    %v2171 = vpack.c.b16 %v1967, %v1963
    %v2172 = vpack.c.b16 %v1968, %v1964
    %v2173 = vpack.c.b16 %v1969, %v1965
    %v2174 = vpack.c.b16 %v1974, %v1970
    %v2175 = vpack.c.b16 %v1975, %v1971
    %v2176 = vpack.c.b16 %v1976, %v1972
    %v2177 = vpack.c.b16 %v1977, %v1973
    %v2178 = vpack.c.b16 %v1982, %v1978
    %v2179 = vpack.c.b16 %v1983, %v1979
    %v2180 = vpack.c.b16 %v1984, %v1980
    %v2181 = vpack.c.b16 %v1985, %v1981
    %v2182 = vpack.c.b16 %v1990, %v1986
    %v2183 = vpack.c.b16 %v1991, %v1987
    %v2184 = vpack.c.b16 %v1992, %v1988
    %v2185 = vpack.c.b16 %v1993, %v1989
    %v2186 = vpack.c.b16 %v1998, %v1994
    %v2187 = vpack.c.b16 %v1999, %v1995
    %v2188 = vpack.c.b16 %v2000, %v1996
    %v2189 = vpack.c.b16 %v2001, %v1997
    %v2190 = vpack.c.b16 %v2006, %v2002
    %v2191 = vpack.c.b16 %v2007, %v2003
    %v2192 = vpack.c.b16 %v2008, %v2004
    %v2193 = vpack.c.b16 %v2009, %v2005
    %v2194 = vpack.c.b16 %v2014, %v2010
    %v2195 = vpack.c.b16 %v2015, %v2011
    %v2196 = vpack.c.b16 %v2016, %v2012
    %v2197 = vpack.c.b16 %v2017, %v2013
    %v2198 = vpack.c.b16 %v2022, %v2018
    %v2199 = vpack.c.b16 %v2023, %v2019
    %v2200 = vpack.c.b16 %v2024, %v2020
    %v2201 = vpack.c.b16 %v2025, %v2021
    %v2202 = vpack.c.b16 %v2030, %v2026
    %v2203 = vpack.c.b16 %v2031, %v2027
    %v2204 = vpack.c.b16 %v2032, %v2028
    %v2205 = vpack.c.b16 %v2033, %v2029
    %v2206 = vpack.c.b16 %v2038, %v2034
    %v2207 = vpack.c.b16 %v2039, %v2035
    %v2208 = vpack.c.b16 %v2040, %v2036
    %v2209 = vpack.c.b16 %v2041, %v2037
    %v2210 = vpack.c.b16 %v2046, %v2042
    %v2211 = vpack.c.b16 %v2047, %v2043
    %v2212 = vpack.c.b16 %v2048, %v2044
    %v2213 = vpack.c.b16 %v2049, %v2045
    %v2214 = vpack.c.b16 %v2054, %v2050
    %v2215 = vpack.c.b16 %v2055, %v2051
    %v2216 = vpack.c.b16 %v2056, %v2052
    %v2217 = vpack.c.b16 %v2057, %v2053
    %v2218 = vpack.c.b16 %v2062, %v2058
    %v2219 = vpack.c.b16 %v2063, %v2059
    %v2220 = vpack.c.b16 %v2064, %v2060
    %v2221 = vpack.c.b16 %v2065, %v2061
    %v2222 = vpack.c.b16 %v2070, %v2066
    %v2223 = vpack.c.b16 %v2071, %v2067
    %v2224 = vpack.c.b16 %v2072, %v2068
    %v2225 = vpack.c.b16 %v2073, %v2069
    %v2226 = vpack.c.b16 %v2078, %v2074
    %v2227 = vpack.c.b16 %v2079, %v2075
    %v2228 = vpack.c.b16 %v2080, %v2076
    %v2229 = vpack.c.b16 %v2081, %v2077
    %v2230 = vpack.c.b16 %v2086, %v2082
    %v2231 = vpack.c.b16 %v2087, %v2083
    %v2232 = vpack.c.b16 %v2088, %v2084
    %v2233 = vpack.c.b16 %v2089, %v2085
    %v2234 = vpack.c.b16 %v2094, %v2090
    %v2235 = vpack.c.b16 %v2095, %v2091
    %v2236 = vpack.c.b16 %v2096, %v2092
    %v2237 = vpack.c.b16 %v2097, %v2093
    %v2238 = vpack.c.b16 %v2102, %v2098
    %v2239 = vpack.c.b16 %v2103, %v2099
    %v2240 = vpack.c.b16 %v2104, %v2100
    %v2241 = vpack.c.b16 %v2105, %v2101
    %v2242 = vpack.c.b16 %v2110, %v2106
    %v2243 = vpack.c.b16 %v2111, %v2107
    %v2244 = vpack.c.b16 %v2112, %v2108
    %v2245 = vpack.c.b16 %v2113, %v2109
    %v2246 = vpack.c.b16 %v2118, %v2114
    %v2247 = vpack.c.b16 %v2119, %v2115
    %v2248 = vpack.c.b16 %v2120, %v2116
    %v2249 = vpack.c.b16 %v2121, %v2117
    %2378 = vmatpush.bf16.msra.mxu0 %v2150
    %2379 = vmatpush.bf16.msra.mxu0 %v2146
    %2380 = vmatpush.bf16.msra.mxu0 %v2142
    %2381 = vmatpush.bf16.msra.mxu0 %v2138
    %2382 = vmatpush.bf16.msra.mxu0 %v2134
    %2383 = vmatpush.bf16.msra.mxu0 %v2130
    %2384 = vmatpush.bf16.msra.mxu0 %v2126
    %2385 = vmatpush.bf16.msra.mxu0 %v2122
    %2386 = vmatmul.bf16.gmra.mxu0 %v1596
    %v2387 = vpop.f32.mrf.mxu0
    %v2388 = vadd.f32 %v1730, %v2387
    %v2389 = vpop.f32.mrf.mxu0
    %2390 = vdwg.mxu0
    %2391 = vmatpush.bf16.msra.mxu0 %v2182
    %2392 = vmatpush.bf16.msra.mxu0 %v2178
    %2393 = vmatpush.bf16.msra.mxu0 %v2174
    %2394 = vmatpush.bf16.msra.mxu0 %v2170
    %2395 = vmatpush.bf16.msra.mxu0 %v2166
    %2396 = vmatpush.bf16.msra.mxu0 %v2162
    %2397 = vmatpush.bf16.msra.mxu0 %v2158
    %2398 = vmatpush.bf16.msra.mxu0 %v2154
    %2399 = vmatmul.bf16.gmra.mxu0 %v1597
    %v2400 = vpop.f32.mrf.mxu0
    %v2401 = vadd.f32 %v2388, %v2400
    %v2402 = vpop.f32.mrf.mxu0
    %2403 = vdwg.mxu0
    %2404 = vmatpush.bf16.msra.mxu0 %v2214
    %2405 = vmatpush.bf16.msra.mxu0 %v2210
    %2406 = vmatpush.bf16.msra.mxu0 %v2206
    %2407 = vmatpush.bf16.msra.mxu0 %v2202
    %2408 = vmatpush.bf16.msra.mxu0 %v2198
    %2409 = vmatpush.bf16.msra.mxu0 %v2194
    %2410 = vmatpush.bf16.msra.mxu0 %v2190
    %2411 = vmatpush.bf16.msra.mxu0 %v2186
    %2412 = vmatmul.bf16.gmra.mxu0 %v1598
    %v2413 = vpop.f32.mrf.mxu0
    %v2414 = vadd.f32 %v2401, %v2413
    %v2415 = vpop.f32.mrf.mxu0
    %2416 = vdwg.mxu0
    %2417 = vmatpush.bf16.msra.mxu0 %v2246
    %2418 = vmatpush.bf16.msra.mxu0 %v2242
    %2419 = vmatpush.bf16.msra.mxu0 %v2238
    %2420 = vmatpush.bf16.msra.mxu0 %v2234
    %2421 = vmatpush.bf16.msra.mxu0 %v2230
    %2422 = vmatpush.bf16.msra.mxu0 %v2226
    %2423 = vmatpush.bf16.msra.mxu0 %v2222
    %2424 = vmatpush.bf16.msra.mxu0 %v2218
    %2425 = vmatmul.bf16.gmra.mxu0 %v1599
    %v2426 = vpop.f32.mrf.mxu0
    %v2427 = vadd.f32 %v2414, %v2426
    %v2428 = vpop.f32.mrf.mxu0
    %2429 = vdwg.mxu0
    %2430 = vmatpush.bf16.msra.mxu0 %v2151
    %2431 = vmatpush.bf16.msra.mxu0 %v2147
    %2432 = vmatpush.bf16.msra.mxu0 %v2143
    %2433 = vmatpush.bf16.msra.mxu0 %v2139
    %2434 = vmatpush.bf16.msra.mxu0 %v2135
    %2435 = vmatpush.bf16.msra.mxu0 %v2131
    %2436 = vmatpush.bf16.msra.mxu0 %v2127
    %2437 = vmatpush.bf16.msra.mxu0 %v2123
    %2438 = vmatmul.bf16.gmra.mxu0 %v1596
    %v2439 = vpop.f32.mrf.mxu0
    %v2440 = vadd.f32 %v1731, %v2439
    %v2441 = vpop.f32.mrf.mxu0
    %2442 = vdwg.mxu0
    %2443 = vmatpush.bf16.msra.mxu0 %v2183
    %2444 = vmatpush.bf16.msra.mxu0 %v2179
    %2445 = vmatpush.bf16.msra.mxu0 %v2175
    %2446 = vmatpush.bf16.msra.mxu0 %v2171
    %2447 = vmatpush.bf16.msra.mxu0 %v2167
    %2448 = vmatpush.bf16.msra.mxu0 %v2163
    %2449 = vmatpush.bf16.msra.mxu0 %v2159
    %2450 = vmatpush.bf16.msra.mxu0 %v2155
    %2451 = vmatmul.bf16.gmra.mxu0 %v1597
    %v2452 = vpop.f32.mrf.mxu0
    %v2453 = vadd.f32 %v2440, %v2452
    %v2454 = vpop.f32.mrf.mxu0
    %2455 = vdwg.mxu0
    %2456 = vmatpush.bf16.msra.mxu0 %v2215
    %2457 = vmatpush.bf16.msra.mxu0 %v2211
    %2458 = vmatpush.bf16.msra.mxu0 %v2207
    %2459 = vmatpush.bf16.msra.mxu0 %v2203
    %2460 = vmatpush.bf16.msra.mxu0 %v2199
    %2461 = vmatpush.bf16.msra.mxu0 %v2195
    %2462 = vmatpush.bf16.msra.mxu0 %v2191
    %2463 = vmatpush.bf16.msra.mxu0 %v2187
    %2464 = vmatmul.bf16.gmra.mxu0 %v1598
    %v2465 = vpop.f32.mrf.mxu0
    %v2466 = vadd.f32 %v2453, %v2465
    %v2467 = vpop.f32.mrf.mxu0
    %2468 = vdwg.mxu0
    %2469 = vmatpush.bf16.msra.mxu0 %v2247
    %2470 = vmatpush.bf16.msra.mxu0 %v2243
    %2471 = vmatpush.bf16.msra.mxu0 %v2239
    %2472 = vmatpush.bf16.msra.mxu0 %v2235
    %2473 = vmatpush.bf16.msra.mxu0 %v2231
    %2474 = vmatpush.bf16.msra.mxu0 %v2227
    %2475 = vmatpush.bf16.msra.mxu0 %v2223
    %2476 = vmatpush.bf16.msra.mxu0 %v2219
    %2477 = vmatmul.bf16.gmra.mxu0 %v1599
    %v2478 = vpop.f32.mrf.mxu0
    %v2479 = vadd.f32 %v2466, %v2478
    %v2480 = vpop.f32.mrf.mxu0
    %2481 = vdwg.mxu0
    %2482 = vmatpush.bf16.msra.mxu0 %v2152
    %2483 = vmatpush.bf16.msra.mxu0 %v2148
    %2484 = vmatpush.bf16.msra.mxu0 %v2144
    %2485 = vmatpush.bf16.msra.mxu0 %v2140
    %2486 = vmatpush.bf16.msra.mxu0 %v2136
    %2487 = vmatpush.bf16.msra.mxu0 %v2132
    %2488 = vmatpush.bf16.msra.mxu0 %v2128
    %2489 = vmatpush.bf16.msra.mxu0 %v2124
    %2490 = vmatmul.bf16.gmra.mxu0 %v1596
    %v2491 = vpop.f32.mrf.mxu0
    %v2492 = vadd.f32 %v1732, %v2491
    %v2493 = vpop.f32.mrf.mxu0
    %2494 = vdwg.mxu0
    %2495 = vmatpush.bf16.msra.mxu0 %v2184
    %2496 = vmatpush.bf16.msra.mxu0 %v2180
    %2497 = vmatpush.bf16.msra.mxu0 %v2176
    %2498 = vmatpush.bf16.msra.mxu0 %v2172
    %2499 = vmatpush.bf16.msra.mxu0 %v2168
    %2500 = vmatpush.bf16.msra.mxu0 %v2164
    %2501 = vmatpush.bf16.msra.mxu0 %v2160
    %2502 = vmatpush.bf16.msra.mxu0 %v2156
    %2503 = vmatmul.bf16.gmra.mxu0 %v1597
    %v2504 = vpop.f32.mrf.mxu0
    %v2505 = vadd.f32 %v2492, %v2504
    %v2506 = vpop.f32.mrf.mxu0
    %2507 = vdwg.mxu0
    %2508 = vmatpush.bf16.msra.mxu0 %v2216
    %2509 = vmatpush.bf16.msra.mxu0 %v2212
    %2510 = vmatpush.bf16.msra.mxu0 %v2208
    %2511 = vmatpush.bf16.msra.mxu0 %v2204
    %2512 = vmatpush.bf16.msra.mxu0 %v2200
    %2513 = vmatpush.bf16.msra.mxu0 %v2196
    %2514 = vmatpush.bf16.msra.mxu0 %v2192
    %2515 = vmatpush.bf16.msra.mxu0 %v2188
    %2516 = vmatmul.bf16.gmra.mxu0 %v1598
    %v2517 = vpop.f32.mrf.mxu0
    %v2518 = vadd.f32 %v2505, %v2517
    %v2519 = vpop.f32.mrf.mxu0
    %2520 = vdwg.mxu0
    %2521 = vmatpush.bf16.msra.mxu0 %v2248
    %2522 = vmatpush.bf16.msra.mxu0 %v2244
    %2523 = vmatpush.bf16.msra.mxu0 %v2240
    %2524 = vmatpush.bf16.msra.mxu0 %v2236
    %2525 = vmatpush.bf16.msra.mxu0 %v2232
    %2526 = vmatpush.bf16.msra.mxu0 %v2228
    %2527 = vmatpush.bf16.msra.mxu0 %v2224
    %2528 = vmatpush.bf16.msra.mxu0 %v2220
    %2529 = vmatmul.bf16.gmra.mxu0 %v1599
    %v2530 = vpop.f32.mrf.mxu0
    %v2531 = vadd.f32 %v2518, %v2530
    %v2532 = vpop.f32.mrf.mxu0
    %2533 = vdwg.mxu0
    %2534 = vmatpush.bf16.msra.mxu0 %v2153
    %2535 = vmatpush.bf16.msra.mxu0 %v2149
    %2536 = vmatpush.bf16.msra.mxu0 %v2145
    %2537 = vmatpush.bf16.msra.mxu0 %v2141
    %2538 = vmatpush.bf16.msra.mxu0 %v2137
    %2539 = vmatpush.bf16.msra.mxu0 %v2133
    %2540 = vmatpush.bf16.msra.mxu0 %v2129
    %2541 = vmatpush.bf16.msra.mxu0 %v2125
    %2542 = vmatmul.bf16.gmra.mxu0 %v1596
    %v2543 = vpop.f32.mrf.mxu0
    %v2544 = vadd.f32 %v1733, %v2543
    %v2545 = vpop.f32.mrf.mxu0
    %2546 = vdwg.mxu0
    %2547 = vmatpush.bf16.msra.mxu0 %v2185
    %2548 = vmatpush.bf16.msra.mxu0 %v2181
    %2549 = vmatpush.bf16.msra.mxu0 %v2177
    %2550 = vmatpush.bf16.msra.mxu0 %v2173
    %2551 = vmatpush.bf16.msra.mxu0 %v2169
    %2552 = vmatpush.bf16.msra.mxu0 %v2165
    %2553 = vmatpush.bf16.msra.mxu0 %v2161
    %2554 = vmatpush.bf16.msra.mxu0 %v2157
    %2555 = vmatmul.bf16.gmra.mxu0 %v1597
    %v2556 = vpop.f32.mrf.mxu0
    %v2557 = vadd.f32 %v2544, %v2556
    %v2558 = vpop.f32.mrf.mxu0
    %2559 = vdwg.mxu0
    %2560 = vmatpush.bf16.msra.mxu0 %v2217
    %2561 = vmatpush.bf16.msra.mxu0 %v2213
    %2562 = vmatpush.bf16.msra.mxu0 %v2209
    %2563 = vmatpush.bf16.msra.mxu0 %v2205
    %2564 = vmatpush.bf16.msra.mxu0 %v2201
    %2565 = vmatpush.bf16.msra.mxu0 %v2197
    %2566 = vmatpush.bf16.msra.mxu0 %v2193
    %2567 = vmatpush.bf16.msra.mxu0 %v2189
    %2568 = vmatmul.bf16.gmra.mxu0 %v1598
    %v2569 = vpop.f32.mrf.mxu0
    %v2570 = vadd.f32 %v2557, %v2569
    %v2571 = vpop.f32.mrf.mxu0
    %2572 = vdwg.mxu0
    %2573 = vmatpush.bf16.msra.mxu0 %v2249
    %2574 = vmatpush.bf16.msra.mxu0 %v2245
    %2575 = vmatpush.bf16.msra.mxu0 %v2241
    %2576 = vmatpush.bf16.msra.mxu0 %v2237
    %2577 = vmatpush.bf16.msra.mxu0 %v2233
    %2578 = vmatpush.bf16.msra.mxu0 %v2229
    %2579 = vmatpush.bf16.msra.mxu0 %v2225
    %2580 = vmatpush.bf16.msra.mxu0 %v2221
    %2581 = vmatmul.bf16.gmra.mxu0 %v1599
    %v2582 = vpop.f32.mrf.mxu0
    %v2583 = vadd.f32 %v2570, %v2582
    %v2584 = vpop.f32.mrf.mxu0
    %2585 = vdwg.mxu0
    %v2586 = vpack.c.bf16 %v2479, %v2427
    %v2587 = vpack.c.bf16 %v2583, %v2531
    %v2588 = vxor.u32 %v2586, 2147516416
    %v2589 = vxor.u32 %v2587, 2147516416
    %v2590 = vunpack.c.l.bf16 %v2588
    %v2591 = vunpack.c.h.bf16 %v2588
    %v2592 = vunpack.c.l.bf16 %v2589
    %v2593 = vunpack.c.h.bf16 %v2589
    %v2594 = vmul.f32 %v2590, 1.442695
    %v2595 = vpow.pop %v2594
    %v2596 = vmul.f32 %v2591, 1.442695
    %v2597 = vpow.pop %v2596
    %v2598 = vmul.f32 %v2592, 1.442695
    %v2599 = vpow.pop %v2598
    %v2600 = vmul.f32 %v2593, 1.442695
    %v2601 = vpow.pop %v2600
    %v2602 = vpack.c.bf16 %v2597, %v2595
    %v2603 = vpack.c.bf16 %v2601, %v2599
    %v2604 = vunpack.c.l.bf16 %v2602
    %v2605 = vunpack.c.h.bf16 %v2602
    %v2606 = vunpack.c.l.bf16 %v2603
    %v2607 = vunpack.c.h.bf16 %v2603
    %v2608 = vadd.f32 %v2604, 1.0
    %v2609 = vadd.f32 %v2605, 1.0
    %v2610 = vadd.f32 %v2606, 1.0
    %v2611 = vadd.f32 %v2607, 1.0
    %v2612 = vpack.c.bf16 %v2609, %v2608
    %v2613 = vpack.c.bf16 %v2611, %v2610
    %v2614 = vunpack.c.h.bf16 %v2612
    %v2615 = vunpack.c.l.bf16 %v2612
    %v2616 = vrcp.pop %v2614
    %v2617 = vmul.f32 %v122, %v2616
    %v2618 = vrcp.pop %v2615
    %v2619 = vmul.f32 %v123, %v2618
    %v2620 = vpack.c.bf16 %v2617, %v2619
    %v2621 = vunpack.c.h.bf16 %v2613
    %v2622 = vunpack.c.l.bf16 %v2613
    %v2623 = vrcp.pop %v2621
    %v2624 = vmul.f32 %v122, %v2623
    %v2625 = vrcp.pop %v2622
    %v2626 = vmul.f32 %v123, %v2625
    %v2627 = vpack.c.bf16 %v2624, %v2626
    %v2628 = vunpack.c.l.bf16 %v2586
    %v2629 = vunpack.c.h.bf16 %v2586
    %v2630 = vunpack.c.l.bf16 %v2587
    %v2631 = vunpack.c.h.bf16 %v2587
    %v2632 = vunpack.c.l.bf16 %v2620
    %v2633 = vunpack.c.h.bf16 %v2620
    %v2634 = vunpack.c.l.bf16 %v2627
    %v2635 = vunpack.c.h.bf16 %v2627
    %v2636 = vmul.f32 %v2628, %v2632
    %v2637 = vmul.f32 %v2629, %v2633
    %v2638 = vmul.f32 %v2630, %v2634
    %v2639 = vmul.f32 %v2631, %v2635
    %v2640 = vpack.c.bf16 %v2636, %v2636
    %v2641 = vpack.c.bf16 %v2637, %v2637
    %v2642 = vpack.c.bf16 %v2638, %v2638
    %v2643 = vpack.c.bf16 %v2639, %v2639
    %v2644 = vld [vmem:[%s17] sm:$0xf]
    %v2645 = vld [vmem:[%s17 + $0x4] sm:$0xf]
    %v2646 = vld [vmem:[%s17 + $0x8] sm:$0xf]
    %v2647 = vld [vmem:[%s17 + $0xc] sm:$0xf]
    %v2648 = vld [vmem:[%s17 + $0x10] sm:$0xf]
    %v2649 = vld [vmem:[%s17 + $0x14] sm:$0xf]
    %v2650 = vld [vmem:[%s17 + $0x18] sm:$0xf]
    %v2651 = vld [vmem:[%s17 + $0x1c] sm:$0xf]
    %v2652 = vld [vmem:[%s17 + $0x20] sm:$0xf]
    %v2653 = vld [vmem:[%s17 + $0x24] sm:$0xf]
    %v2654 = vld [vmem:[%s17 + $0x28] sm:$0xf]
    %v2655 = vld [vmem:[%s17 + $0x2c] sm:$0xf]
    %v2656 = vld [vmem:[%s17 + $0x30] sm:$0xf]
    %v2657 = vld [vmem:[%s17 + $0x34] sm:$0xf]
    %v2658 = vld [vmem:[%s17 + $0x38] sm:$0xf]
    %v2659 = vld [vmem:[%s17 + $0x3c] sm:$0xf]
    %v2660 = vld [vmem:[%s17 + $0x40] sm:$0xf]
    %v2661 = vld [vmem:[%s17 + $0x44] sm:$0xf]
    %v2662 = vld [vmem:[%s17 + $0x48] sm:$0xf]
    %v2663 = vld [vmem:[%s17 + $0x4c] sm:$0xf]
    %v2664 = vld [vmem:[%s17 + $0x50] sm:$0xf]
    %v2665 = vld [vmem:[%s17 + $0x54] sm:$0xf]
    %v2666 = vld [vmem:[%s17 + $0x58] sm:$0xf]
    %v2667 = vld [vmem:[%s17 + $0x5c] sm:$0xf]
    %v2668 = vld [vmem:[%s17 + $0x60] sm:$0xf]
    %v2669 = vld [vmem:[%s17 + $0x64] sm:$0xf]
    %v2670 = vld [vmem:[%s17 + $0x68] sm:$0xf]
    %v2671 = vld [vmem:[%s17 + $0x6c] sm:$0xf]
    %v2672 = vld [vmem:[%s17 + $0x70] sm:$0xf]
    %v2673 = vld [vmem:[%s17 + $0x74] sm:$0xf]
    %v2674 = vld [vmem:[%s17 + $0x78] sm:$0xf]
    %v2675 = vld [vmem:[%s17 + $0x7c] sm:$0xf]
    %v2676 = vld [vmem:[%s17 + $0x80] sm:$0xf]
    %v2677 = vld [vmem:[%s17 + $0x84] sm:$0xf]
    %v2678 = vld [vmem:[%s17 + $0x88] sm:$0xf]
    %v2679 = vld [vmem:[%s17 + $0x8c] sm:$0xf]
    %v2680 = vld [vmem:[%s17 + $0x90] sm:$0xf]
    %v2681 = vld [vmem:[%s17 + $0x94] sm:$0xf]
    %v2682 = vld [vmem:[%s17 + $0x98] sm:$0xf]
    %v2683 = vld [vmem:[%s17 + $0x9c] sm:$0xf]
    %v2684 = vld [vmem:[%s17 + $0xa0] sm:$0xf]
    %v2685 = vld [vmem:[%s17 + $0xa4] sm:$0xf]
    %v2686 = vld [vmem:[%s17 + $0xa8] sm:$0xf]
    %v2687 = vld [vmem:[%s17 + $0xac] sm:$0xf]
    %v2688 = vld [vmem:[%s17 + $0xb0] sm:$0xf]
    %v2689 = vld [vmem:[%s17 + $0xb4] sm:$0xf]
    %v2690 = vld [vmem:[%s17 + $0xb8] sm:$0xf]
    %v2691 = vld [vmem:[%s17 + $0xbc] sm:$0xf]
    %v2692 = vld [vmem:[%s17 + $0xc0] sm:$0xf]
    %v2693 = vld [vmem:[%s17 + $0xc4] sm:$0xf]
    %v2694 = vld [vmem:[%s17 + $0xc8] sm:$0xf]
    %v2695 = vld [vmem:[%s17 + $0xcc] sm:$0xf]
    %v2696 = vld [vmem:[%s17 + $0xd0] sm:$0xf]
    %v2697 = vld [vmem:[%s17 + $0xd4] sm:$0xf]
    %v2698 = vld [vmem:[%s17 + $0xd8] sm:$0xf]
    %v2699 = vld [vmem:[%s17 + $0xdc] sm:$0xf]
    %v2700 = vld [vmem:[%s17 + $0xe0] sm:$0xf]
    %v2701 = vld [vmem:[%s17 + $0xe4] sm:$0xf]
    %v2702 = vld [vmem:[%s17 + $0xe8] sm:$0xf]
    %v2703 = vld [vmem:[%s17 + $0xec] sm:$0xf]
    %v2704 = vld [vmem:[%s17 + $0xf0] sm:$0xf]
    %v2705 = vld [vmem:[%s17 + $0xf4] sm:$0xf]
    %v2706 = vld [vmem:[%s17 + $0xf8] sm:$0xf]
    %v2707 = vld [vmem:[%s17 + $0xfc] sm:$0xf]
    %v2708 = vld [vmem:[%s18] sm:$0x1]
    %v2710 = vperm.slane %v2708, 0
    %v2776 = vunpack.c.l.b16 %v2644
    %v2777 = vunpack.c.l.b16 %v2645
    %v2778 = vunpack.c.l.b16 %v2646
    %v2779 = vunpack.c.l.b16 %v2647
    %v2780 = vunpack.c.l.b16 %v2648
    %v2781 = vunpack.c.l.b16 %v2649
    %v2782 = vunpack.c.l.b16 %v2650
    %v2783 = vunpack.c.l.b16 %v2651
    %v2784 = vunpack.c.l.b16 %v2652
    %v2785 = vunpack.c.l.b16 %v2653
    %v2786 = vunpack.c.l.b16 %v2654
    %v2787 = vunpack.c.l.b16 %v2655
    %v2788 = vunpack.c.l.b16 %v2656
    %v2789 = vunpack.c.l.b16 %v2657
    %v2790 = vunpack.c.l.b16 %v2658
    %v2791 = vunpack.c.l.b16 %v2659
    %v2792 = vunpack.c.l.b16 %v2660
    %v2793 = vunpack.c.l.b16 %v2661
    %v2794 = vunpack.c.l.b16 %v2662
    %v2795 = vunpack.c.l.b16 %v2663
    %v2796 = vunpack.c.l.b16 %v2664
    %v2797 = vunpack.c.l.b16 %v2665
    %v2798 = vunpack.c.l.b16 %v2666
    %v2799 = vunpack.c.l.b16 %v2667
    %v2800 = vunpack.c.l.b16 %v2668
    %v2801 = vunpack.c.l.b16 %v2669
    %v2802 = vunpack.c.l.b16 %v2670
    %v2803 = vunpack.c.l.b16 %v2671
    %v2804 = vunpack.c.l.b16 %v2672
    %v2805 = vunpack.c.l.b16 %v2673
    %v2806 = vunpack.c.l.b16 %v2674
    %v2807 = vunpack.c.l.b16 %v2675
    %v2808 = vunpack.c.l.b16 %v2676
    %v2809 = vunpack.c.l.b16 %v2677
    %v2810 = vunpack.c.l.b16 %v2678
    %v2811 = vunpack.c.l.b16 %v2679
    %v2812 = vunpack.c.l.b16 %v2680
    %v2813 = vunpack.c.l.b16 %v2681
    %v2814 = vunpack.c.l.b16 %v2682
    %v2815 = vunpack.c.l.b16 %v2683
    %v2816 = vunpack.c.l.b16 %v2684
    %v2817 = vunpack.c.l.b16 %v2685
    %v2818 = vunpack.c.l.b16 %v2686
    %v2819 = vunpack.c.l.b16 %v2687
    %v2820 = vunpack.c.l.b16 %v2688
    %v2821 = vunpack.c.l.b16 %v2689
    %v2822 = vunpack.c.l.b16 %v2690
    %v2823 = vunpack.c.l.b16 %v2691
    %v2824 = vunpack.c.l.b16 %v2692
    %v2825 = vunpack.c.l.b16 %v2693
    %v2826 = vunpack.c.l.b16 %v2694
    %v2827 = vunpack.c.l.b16 %v2695
    %v2828 = vunpack.c.l.b16 %v2696
    %v2829 = vunpack.c.l.b16 %v2697
    %v2830 = vunpack.c.l.b16 %v2698
    %v2831 = vunpack.c.l.b16 %v2699
    %v2832 = vunpack.c.l.b16 %v2700
    %v2833 = vunpack.c.l.b16 %v2701
    %v2834 = vunpack.c.l.b16 %v2702
    %v2835 = vunpack.c.l.b16 %v2703
    %v2836 = vunpack.c.l.b16 %v2704
    %v2837 = vunpack.c.l.b16 %v2705
    %v2838 = vunpack.c.l.b16 %v2706
    %v2839 = vunpack.c.l.b16 %v2707
    %v2840 = vpack.c.b16 %v2777, %v2776
    %v2841 = vpack.c.b16 %v2779, %v2778
    %v2842 = vpack.c.b16 %v2781, %v2780
    %v2843 = vpack.c.b16 %v2783, %v2782
    %v2844 = vpack.c.b16 %v2785, %v2784
    %v2845 = vpack.c.b16 %v2787, %v2786
    %v2846 = vpack.c.b16 %v2789, %v2788
    %v2847 = vpack.c.b16 %v2791, %v2790
    %v2848 = vpack.c.b16 %v2793, %v2792
    %v2849 = vpack.c.b16 %v2795, %v2794
    %v2850 = vpack.c.b16 %v2797, %v2796
    %v2851 = vpack.c.b16 %v2799, %v2798
    %v2852 = vpack.c.b16 %v2801, %v2800
    %v2853 = vpack.c.b16 %v2803, %v2802
    %v2854 = vpack.c.b16 %v2805, %v2804
    %v2855 = vpack.c.b16 %v2807, %v2806
    %v2856 = vpack.c.b16 %v2809, %v2808
    %v2857 = vpack.c.b16 %v2811, %v2810
    %v2858 = vpack.c.b16 %v2813, %v2812
    %v2859 = vpack.c.b16 %v2815, %v2814
    %v2860 = vpack.c.b16 %v2817, %v2816
    %v2861 = vpack.c.b16 %v2819, %v2818
    %v2862 = vpack.c.b16 %v2821, %v2820
    %v2863 = vpack.c.b16 %v2823, %v2822
    %v2864 = vpack.c.b16 %v2825, %v2824
    %v2865 = vpack.c.b16 %v2827, %v2826
    %v2866 = vpack.c.b16 %v2829, %v2828
    %v2867 = vpack.c.b16 %v2831, %v2830
    %v2868 = vpack.c.b16 %v2833, %v2832
    %v2869 = vpack.c.b16 %v2835, %v2834
    %v2870 = vpack.c.b16 %v2837, %v2836
    %v2871 = vpack.c.b16 %v2839, %v2838
    %2904 = vmatpush.bf16.msra.mxu0 %v2847
    %2905 = vmatpush.bf16.msra.mxu0 %v2846
    %2906 = vmatpush.bf16.msra.mxu0 %v2845
    %2907 = vmatpush.bf16.msra.mxu0 %v2844
    %2908 = vmatpush.bf16.msra.mxu0 %v2843
    %2909 = vmatpush.bf16.msra.mxu0 %v2842
    %2910 = vmatpush.bf16.msra.mxu0 %v2841
    %2911 = vmatpush.bf16.msra.mxu0 %v2840
    %2912 = vmatmul.bf16.gmra.mxu0 %v2640
    %v2913 = vpop.f32.mrf.mxu0
    %v2914 = vadd.f32 %v2710, %v2913
    %v2915 = vpop.f32.mrf.mxu0
    %2916 = vdwg.mxu0
    %2917 = vmatpush.bf16.msra.mxu0 %v2855
    %2918 = vmatpush.bf16.msra.mxu0 %v2854
    %2919 = vmatpush.bf16.msra.mxu0 %v2853
    %2920 = vmatpush.bf16.msra.mxu0 %v2852
    %2921 = vmatpush.bf16.msra.mxu0 %v2851
    %2922 = vmatpush.bf16.msra.mxu0 %v2850
    %2923 = vmatpush.bf16.msra.mxu0 %v2849
    %2924 = vmatpush.bf16.msra.mxu0 %v2848
    %2925 = vmatmul.bf16.gmra.mxu0 %v2641
    %v2926 = vpop.f32.mrf.mxu0
    %v2927 = vadd.f32 %v2914, %v2926
    %v2928 = vpop.f32.mrf.mxu0
    %2929 = vdwg.mxu0
    %2930 = vmatpush.bf16.msra.mxu0 %v2863
    %2931 = vmatpush.bf16.msra.mxu0 %v2862
    %2932 = vmatpush.bf16.msra.mxu0 %v2861
    %2933 = vmatpush.bf16.msra.mxu0 %v2860
    %2934 = vmatpush.bf16.msra.mxu0 %v2859
    %2935 = vmatpush.bf16.msra.mxu0 %v2858
    %2936 = vmatpush.bf16.msra.mxu0 %v2857
    %2937 = vmatpush.bf16.msra.mxu0 %v2856
    %2938 = vmatmul.bf16.gmra.mxu0 %v2642
    %v2939 = vpop.f32.mrf.mxu0
    %v2940 = vadd.f32 %v2927, %v2939
    %v2941 = vpop.f32.mrf.mxu0
    %2942 = vdwg.mxu0
    %2943 = vmatpush.bf16.msra.mxu0 %v2871
    %2944 = vmatpush.bf16.msra.mxu0 %v2870
    %2945 = vmatpush.bf16.msra.mxu0 %v2869
    %2946 = vmatpush.bf16.msra.mxu0 %v2868
    %2947 = vmatpush.bf16.msra.mxu0 %v2867
    %2948 = vmatpush.bf16.msra.mxu0 %v2866
    %2949 = vmatpush.bf16.msra.mxu0 %v2865
    %2950 = vmatpush.bf16.msra.mxu0 %v2864
    %2951 = vmatmul.bf16.gmra.mxu0 %v2643
    %v2952 = vpop.f32.mrf.mxu0
    %v2953 = vadd.f32 %v2940, %v2952
    %v2954 = vpop.f32.mrf.mxu0
    %2955 = vdwg.mxu0
    %vm2956 = vcmask 56320
    %2957 = vst.msk [vmem:[#allocation7] sm:$0xff] %vm2956, %v2953
    // Predicated region
    $region86: #{tpu_custom_call.1} parent=1 // pred_check
      _
    $region87: #{tpu_custom_call.1} parent=1 // pred_check_branch
      %2959 = sbr.rel (0) target = $region89
    $region88: #{tpu_custom_call.1} parent=1 // pred_region
      %2961 = vsyncadd [#allocation4], 0
      %s2963 = sshll.u32 [#allocation7], 4
      %s2964 = int_to_ptr.vmem [resolvable:$true] %s2963
      %s2965 = sshll.u32 %s19, 4
      %s2966 = int_to_ptr.hbm [resolvable:$true] %s2965
      %2968 = dma.vmem_to_hbm [thread:$0]  %s2964, 128, %s2966, [#allocation4]
    $region89: #{tpu_custom_call.1} parent=1 // pred_fallthru
      _
    // Predicated region
    $region90: #{tpu_custom_call.1} parent=1 // pred_check
      _
    $region91: #{tpu_custom_call.1} parent=1 // pred_check_branch
      %2970 = sbr.rel (0) target = $region93
    $region92: #{tpu_custom_call.1} parent=1 // pred_region
      %2972 = dma.done [#allocation4], 128
    $region93: #{tpu_custom_call.1} parent=1 // pred_fallthru
      _
    %2973 = vsyncpa [#allocation3], 1
    %2974 = vsyncpa [#allocation6], 1
    %2975 = vsyncpa [#allocation4], 1

</llo_original>
